<compile_context>
chip_gen: v5e
topology: v5e:2x2
jax: 0.10.0
libtpu: 0.0.40
codegen_flags: <defaults>
</compile_context>

<pallas_src>
import jax
import jax.numpy as jnp
from jax.experimental import pallas as pl
from jax.experimental.pallas import tpu as pltpu


def _encoder_kernel(x_ref, w1_ref, b1_ref, w2_ref, b2_ref, out_ref):
    # Stage 1: x @ W1 (+ b1), ReLU — MXU matmul, f32 accumulation.
    h = jnp.dot(x_ref[...], w1_ref[...],
                preferred_element_type=jnp.float32)          # [TB, Hp] f32
    h = jnp.maximum(h + b1_ref[...], 0.0)
    # Stage 2: fused mean/std projection -> one [TB, 2Z] result.
    out = jnp.dot(h.astype(w2_ref.dtype), w2_ref[...],
                  preferred_element_type=jnp.float32) + b2_ref[...]
    out_ref[...] = out.astype(out_ref.dtype)


def encoder_forward(x, w1, b1, wm, bm, ws, bs, *, block_b=256, use_bf16=True):
    """x: [B, 784]; w1: [784, H]; wm/ws: [H, Z]; b*: [1, dim] (all f32).

    Weights are stored pre-transposed as [in, out] (== PyTorch weight.T) so
    the kernel does plain `x @ W` on the MXU. Returns (mean, std), each
    [B, Z] float32.
    """
    B, D = x.shape
    H = w1.shape[1]
    Z = wm.shape[1]

    # --- pad hidden dim to a multiple of 128 (lane-dense h, clean MXU tiles)
    H_pad = pl.cdiv(H, 128) * 128
    if H_pad != H:
        w1 = jnp.pad(w1, ((0, 0), (0, H_pad - H)))
        b1 = jnp.pad(b1, ((0, 0), (0, H_pad - H)))
        wm = jnp.pad(wm, ((0, H_pad - H), (0, 0)))
        ws = jnp.pad(ws, ((0, H_pad - H), (0, 0)))

    # --- fuse the mean/std projections into a single [H_pad, 2Z] weight
    w2 = jnp.concatenate([wm, ws], axis=1)          # [H_pad, 2Z]
    b2 = jnp.concatenate([bm, bs], axis=1)          # [1, 2Z]

    # --- compute dtype: bf16 operands, f32 accumulation (biases stay f32)
    cdt = jnp.bfloat16 if use_bf16 else jnp.float32
    w1c = w1.astype(cdt)
    w2c = w2.astype(cdt)
    xc = x.astype(cdt)

    # --- batch tile: sublane-aligned, capped by block_b; pad B to a multiple
    tb = min(block_b, pl.cdiv(B, 8) * 8)
    B_pad = pl.cdiv(B, tb) * tb
    if B_pad != B:
        xc = jnp.pad(xc, ((0, B_pad - B), (0, 0)))

    grid = (B_pad // tb,)
    flops = 2 * B_pad * (D * H_pad + H_pad * 2 * Z)
    bytes_accessed = int(
        xc.size * xc.dtype.itemsize
        + w1c.size * w1c.dtype.itemsize
        + w2c.size * w2c.dtype.itemsize
        + b1.size * 4 + b2.size * 4
        + B_pad * 2 * Z * 4)

    out = pl.pallas_call(
        _encoder_kernel,
        out_shape=jax.ShapeDtypeStruct((B_pad, 2 * Z), jnp.float32),
        grid=grid,
        in_specs=[
            pl.BlockSpec((tb, D), lambda i: (i, 0)),         # x: tiles over batch
            pl.BlockSpec((D, H_pad), lambda i: (0, 0)),      # W1: resident
            pl.BlockSpec((1, H_pad), lambda i: (0, 0)),      # b1: resident
            pl.BlockSpec((H_pad, 2 * Z), lambda i: (0, 0)),  # fused W2: resident
            pl.BlockSpec((1, 2 * Z), lambda i: (0, 0)),      # fused b2: resident
        ],
        out_specs=pl.BlockSpec((tb, 2 * Z), lambda i: (i, 0)),
        compiler_params=pltpu.CompilerParams(
            dimension_semantics=("parallel",)),
        cost_estimate=pl.CostEstimate(
            flops=flops, transcendentals=0, bytes_accessed=bytes_accessed),
    )(xc, w1c, b1, w2c, b2)

    mean = out[:B, :Z]
    std = out[:B, Z:]
    return mean, std


def init_params(key, in_dim=784, hidden_dim=500, z_dim=20):
    """Deterministic synthetic parameters (shapes match the nn.Linear layers,
    stored as [in, out] == PyTorch weight.T)."""
    k1, k2, k3, k4, k5, k6 = jax.random.split(key, 6)
    s1 = 1.0 / jnp.sqrt(in_dim)
    s2 = 1.0 / jnp.sqrt(hidden_dim)
    w1 = jax.random.uniform(k1, (in_dim, hidden_dim), jnp.float32, -s1, s1)
    b1 = jax.random.uniform(k2, (1, hidden_dim), jnp.float32, -s1, s1)
    wm = jax.random.uniform(k3, (hidden_dim, z_dim), jnp.float32, -s2, s2)
    bm = jax.random.uniform(k4, (1, z_dim), jnp.float32, -s2, s2)
    ws = jax.random.uniform(k5, (hidden_dim, z_dim), jnp.float32, -s2, s2)
    bs = jax.random.uniform(k6, (1, z_dim), jnp.float32, -s2, s2)
    return w1, b1, wm, bm, ws, bs


if __name__ == "__main__":
    key = jax.random.PRNGKey(0)
    k_x, k_p = jax.random.split(key)

    batch, in_dim, hidden_dim, z_dim = 16, 784, 500, 20
    x = jax.random.normal(k_x, (batch, in_dim), dtype=jnp.float32)
    params = init_params(k_p, in_dim, hidden_dim, z_dim)
    w1, b1, wm, bm, ws, bs = params

    # f32 reference (exact module semantics)
    h_ref = jnp.maximum(x @ w1 + b1, 0.0)
    mean_ref = h_ref @ wm + bm
    std_ref = h_ref @ ws + bs

    # --- f32 path, small block_b so the multi-step batch grid is exercised
    fwd_f32 = jax.jit(
        lambda xx, *p: encoder_forward(xx, *p, block_b=8, use_bf16=False))
    mean32, std32 = fwd_f32(x, *params)
    jax.block_until_ready((mean32, std32))
    assert mean32.shape == (batch, z_dim) and std32.shape == (batch, z_dim)
    assert jnp.allclose(mean32, mean_ref, atol=1e-4, rtol=1e-4)
    assert jnp.allclose(std32, std_ref, atol=1e-4, rtol=1e-4)

    # --- default fast path: bf16 operands, f32 accumulation
    fwd = jax.jit(lambda xx, *p: encoder_forward(xx, *p))
    mean, std = fwd(x, *params)
    jax.block_until_ready((mean, std))
    assert mean.shape == (batch, z_dim) and std.shape == (batch, z_dim)

    # bf16-matched JAX reference (same operand dtypes, f32 accumulation)
    xb = x.astype(jnp.bfloat16)
    hb = jnp.maximum(
        jnp.dot(xb, w1.astype(jnp.bfloat16),
                preferred_element_type=jnp.float32) + b1, 0.0)
    hbb = hb.astype(jnp.bfloat16)
    mean_bref = jnp.dot(hbb, wm.astype(jnp.bfloat16),
                        preferred_element_type=jnp.float32) + bm
    std_bref = jnp.dot(hbb, ws.astype(jnp.bfloat16),
                       preferred_element_type=jnp.float32) + bs
    assert jnp.allclose(mean, mean_bref, atol=2e-3, rtol=2e-3)
    assert jnp.allclose(std, std_bref, atol=2e-3, rtol=2e-3)
    # loose sanity check against the exact f32 semantics
    assert jnp.allclose(mean, mean_ref, atol=5e-2, rtol=5e-2)
    assert jnp.allclose(std, std_ref, atol=5e-2, rtol=5e-2)

    print("KERNEL_OK")
</pallas_src>

<mosaic_0001>
module attributes {stable_mosaic.version = 11 : i64} {
  func.func @_encoder_kernel(%arg0: i32, %arg1: memref<8x784xf32, #tpu.memory_space<vmem>>, %arg2: memref<784x512xf32, #tpu.memory_space<vmem>>, %arg3: memref<1x512xf32, #tpu.memory_space<vmem>>, %arg4: memref<512x40xf32, #tpu.memory_space<vmem>>, %arg5: memref<1x40xf32, #tpu.memory_space<vmem>>, %arg6: memref<8x40xf32, #tpu.memory_space<vmem>>) attributes {dimension_semantics = [#tpu.dimension_semantics<parallel>], iteration_bounds = array<i64: 2>, scalar_prefetch = 0 : i64, scratch_operands = 0 : i64, tpu.core_type = #tpu.core_type<tc>, window_params = [{transform_indices = @transform_0, window_bounds = array<i64: 8, 784>}, {pipeline_mode = #tpu.pipeline_mode<synchronous>, transform_indices = @transform_1, window_bounds = array<i64: 784, 512>}, {pipeline_mode = #tpu.pipeline_mode<synchronous>, transform_indices = @transform_2, window_bounds = array<i64: 1, 512>}, {pipeline_mode = #tpu.pipeline_mode<synchronous>, transform_indices = @transform_3, window_bounds = array<i64: 512, 40>}, {pipeline_mode = #tpu.pipeline_mode<synchronous>, transform_indices = @transform_4, window_bounds = array<i64: 1, 40>}, {transform_indices = @transform_5, window_bounds = array<i64: 8, 40>}]} {
    %c0 = arith.constant 0 : index
    %c0_0 = arith.constant 0 : index
    %0 = vector.load %arg1[%c0, %c0_0] : memref<8x784xf32, #tpu.memory_space<vmem>>, vector<8x784xf32>
    %c0_1 = arith.constant 0 : index
    %c0_2 = arith.constant 0 : index
    %1 = vector.load %arg2[%c0_1, %c0_2] : memref<784x512xf32, #tpu.memory_space<vmem>>, vector<784x512xf32>
    %cst = arith.constant dense<0.000000e+00> : vector<8x512xf32>
    %2 = tpu.matmul %0, %1, %cst {dimension_numbers = #tpu.dot_dimension_numbers<[1], [0], [0], [1], [0, 0, 1, 1], [], []>} : vector<8x784xf32>, vector<784x512xf32>, vector<8x512xf32> -> vector<8x512xf32>
    %c0_3 = arith.constant 0 : index
    %c0_4 = arith.constant 0 : index
    %3 = vector.load %arg3[%c0_3, %c0_4] : memref<1x512xf32, #tpu.memory_space<vmem>>, vector<1x512xf32>
    %4 = vector.broadcast %3 : vector<1x512xf32> to vector<8x512xf32>
    %5 = arith.addf %2, %4 : vector<8x512xf32>
    %cst_5 = arith.constant 0.000000e+00 : f32
    %6 = vector.broadcast %cst_5 : f32 to vector<8x512xf32>
    %7 = arith.maximumf %5, %6 : vector<8x512xf32>
    %c0_6 = arith.constant 0 : index
    %c0_7 = arith.constant 0 : index
    %8 = vector.load %arg4[%c0_6, %c0_7] : memref<512x40xf32, #tpu.memory_space<vmem>>, vector<512x40xf32>
    %cst_8 = arith.constant dense<0.000000e+00> : vector<8x40xf32>
    %9 = tpu.matmul %7, %8, %cst_8 {dimension_numbers = #tpu.dot_dimension_numbers<[1], [0], [0], [1], [0, 0, 1, 1], [], []>} : vector<8x512xf32>, vector<512x40xf32>, vector<8x40xf32> -> vector<8x40xf32>
    %c0_9 = arith.constant 0 : index
    %c0_10 = arith.constant 0 : index
    %10 = vector.load %arg5[%c0_9, %c0_10] : memref<1x40xf32, #tpu.memory_space<vmem>>, vector<1x40xf32>
    %11 = vector.broadcast %10 : vector<1x40xf32> to vector<8x40xf32>
    %12 = arith.addf %9, %11 : vector<8x40xf32>
    %c0_11 = arith.constant 0 : index
    %c0_12 = arith.constant 0 : index
    %13 = vector.load %arg6[%c0_11, %c0_12] : memref<8x40xf32, #tpu.memory_space<vmem>>, vector<8x40xf32>
    tpu.vector_store %arg6[%c0_11, %c0_12], %12 {strides = array<i32>} : memref<8x40xf32, #tpu.memory_space<vmem>>, vector<8x40xf32>,
    return
  }
  func.func @transform_0(%arg0: i32) -> (i32, i32) {
    %c0_i32 = arith.constant 0 : i32
    %c0_i32_0 = arith.constant 0 : i32
    return %arg0, %c0_i32 : i32, i32
  }
  func.func @transform_1(%arg0: i32) -> (i32, i32) {
    %c0_i32 = arith.constant 0 : i32
    %c0_i32_0 = arith.constant 0 : i32
    %c0_i32_1 = arith.constant 0 : i32
    return %c0_i32, %c0_i32_0 : i32, i32
  }
  func.func @transform_2(%arg0: i32) -> (i32, i32) {
    %c0_i32 = arith.constant 0 : i32
    %c0_i32_0 = arith.constant 0 : i32
    %c0_i32_1 = arith.constant 0 : i32
    return %c0_i32, %c0_i32_0 : i32, i32
  }
  func.func @transform_3(%arg0: i32) -> (i32, i32) {
    %c0_i32 = arith.constant 0 : i32
    %c0_i32_0 = arith.constant 0 : i32
    %c0_i32_1 = arith.constant 0 : i32
    return %c0_i32, %c0_i32_0 : i32, i32
  }
  func.func @transform_4(%arg0: i32) -> (i32, i32) {
    %c0_i32 = arith.constant 0 : i32
    %c0_i32_0 = arith.constant 0 : i32
    %c0_i32_1 = arith.constant 0 : i32
    return %c0_i32, %c0_i32_0 : i32, i32
  }
  func.func @transform_5(%arg0: i32) -> (i32, i32) {
    %c0_i32 = arith.constant 0 : i32
    %c0_i32_0 = arith.constant 0 : i32
    return %arg0, %c0_i32 : i32, i32
  }
}

</mosaic_0001>

<llo_original>
// kernel: _lambda_.1
$region0: #{_lambda_.1}
  #allocation0 [shape = 'u32[]', space=smem, size = 0x4, offset = 0x4, fixed_abs, tag = 'smem constant byte address 0x4 - core index']
  #allocation1 [shape = 'u32[72,128]{1,0:T(1,128)}', space=vmem, size = 0x9000, scoped, tag = 'internal scratch']
  %s0 = inlined_call_operand.vmem [shape: f32[16,784], index: 0, kind: input, shape index: {}]
  %s1 = inlined_call_operand.vmem [shape: f32[784,512], index: 1, kind: input, shape index: {}]
  %s2 = inlined_call_operand.vmem [shape: f32[1,512], index: 2, kind: input, shape index: {}]
  %s3 = inlined_call_operand.vmem [shape: f32[512,40], index: 3, kind: input, shape index: {}]
  %s4 = inlined_call_operand.vmem [shape: f32[1,40], index: 4, kind: input, shape index: {}]
  %s5 = inlined_call_operand.vmem [shape: f32[16,40], index: 5, kind: output, shape index: {}]
  %s6 = sld [smem:[#allocation0]]
  $region53: #{_lambda_.1} parent=0
    _
  %s8 = ssub.s32 1, %s6
  %s9 = scalar_select 0, %s8, %s6
  loop: start=0, step=1, limit=4
  $region2: #{_lambda_.1} parent=0 // loop_pre_header
    _
  $region3: #{_lambda_.1} parent=0 // loop_header
    %s11 = sphi 0, %s15
    %p12 = scmp.ge.s32.totalorder %s11, 4
    %s21 = sphi 0, %s23
    %s24 = sphi 0, %s21
    %s25 = sphi 0, %s24
    %s41 = sphi 0, %s25
    %s45 = sphi 0, %s45
    %s47 = sphi 0, %s45
    %s48 = sphi 0, %s47
    %s62 = sphi 0, %s48
    %s66 = sphi 0, %s66
    %s68 = sphi 0, %s66
    %s69 = sphi 0, %s68
    %s83 = sphi 0, %s69
    %s87 = sphi 0, %s87
    %s89 = sphi 0, %s87
    %s90 = sphi 0, %s89
    %s104 = sphi 0, %s90
    %s108 = sphi 0, %s108
    %s110 = sphi 0, %s108
    %s111 = sphi 0, %s110
    %s125 = sphi 0, %s111
    %s131 = sphi 0, %s133
    %s134 = sphi 0, %s131
    %s135 = sphi 0, %s134
    %s151 = sphi 0, %s135
  $region4: #{_lambda_.1} parent=0 // loop_header_branch
    %14 = sbr.rel (%p12) target = $region8
  $region5: #{_lambda_.1} parent=0 // loop_body
    %s16 = ssub.s32 %s11, 1
    %s17 = ssub.s32 %s11, 2
    %s18 = sadd.s32 %s11, 1
    %s19 = ssub.s32 %s11, %s18
    %p20 = scmp.eq.s32.totalorder %s19, 0
    %s22 = sadd.s32 %s21, 1
    %s23 = scalar_select %p20, %s21, %s22
    %p26 = pneg %p20
    %p27 = scmp.eq.s32.totalorder %s11, 1
    %p28 = por %p26, %p27
    %p29 = scmp.ne.s32.totalorder %s21, %s24
    %p30 = scmp.eq.s32.totalorder %s11, 0
    %p31 = por %p29, %p30
    %p32 = scmp.ne.s32.totalorder %s21, %s24
    %p33 = scmp.eq.s32.totalorder %s16, 1
    %p34 = por %p32, %p33
    %p35 = scmp.ne.s32.totalorder %s24, %s25
    %p36 = scmp.eq.s32.totalorder %s16, 0
    %p37 = por %p35, %p36
    %p38 = scmp.ne.s32.totalorder %s24, %s25
    %p39 = scmp.eq.s32.totalorder %s17, 1
    %p40 = por %p38, %p39
    %p42 = scmp.ne.s32.totalorder %s25, %s41
    %p43 = scmp.eq.s32.totalorder %s17, 0
    %p44 = por %p42, %p43
    %s46 = sadd.s32 %s45, 1
    %p49 = scmp.eq.s32.totalorder %s11, 1
    %p50 = scmp.ne.s32.totalorder %s45, %s47
    %p51 = scmp.eq.s32.totalorder %s11, 0
    %p52 = por %p50, %p51
    %p53 = scmp.ne.s32.totalorder %s45, %s47
    %p54 = scmp.eq.s32.totalorder %s16, 1
    %p55 = por %p53, %p54
    %p56 = scmp.ne.s32.totalorder %s47, %s48
    %p57 = scmp.eq.s32.totalorder %s16, 0
    %p58 = por %p56, %p57
    %p59 = scmp.ne.s32.totalorder %s47, %s48
    %p60 = scmp.eq.s32.totalorder %s17, 1
    %p61 = por %p59, %p60
    %p63 = scmp.ne.s32.totalorder %s48, %s62
    %p64 = scmp.eq.s32.totalorder %s17, 0
    %p65 = por %p63, %p64
    %s67 = sadd.s32 %s66, 1
    %p70 = scmp.eq.s32.totalorder %s11, 1
    %p71 = scmp.ne.s32.totalorder %s66, %s68
    %p72 = scmp.eq.s32.totalorder %s11, 0
    %p73 = por %p71, %p72
    %p74 = scmp.ne.s32.totalorder %s66, %s68
    %p75 = scmp.eq.s32.totalorder %s16, 1
    %p76 = por %p74, %p75
    %p77 = scmp.ne.s32.totalorder %s68, %s69
    %p78 = scmp.eq.s32.totalorder %s16, 0
    %p79 = por %p77, %p78
    %p80 = scmp.ne.s32.totalorder %s68, %s69
    %p81 = scmp.eq.s32.totalorder %s17, 1
    %p82 = por %p80, %p81
    %p84 = scmp.ne.s32.totalorder %s69, %s83
    %p85 = scmp.eq.s32.totalorder %s17, 0
    %p86 = por %p84, %p85
    %s88 = sadd.s32 %s87, 1
    %p91 = scmp.eq.s32.totalorder %s11, 1
    %p92 = scmp.ne.s32.totalorder %s87, %s89
    %p93 = scmp.eq.s32.totalorder %s11, 0
    %p94 = por %p92, %p93
    %p95 = scmp.ne.s32.totalorder %s87, %s89
    %p96 = scmp.eq.s32.totalorder %s16, 1
    %p97 = por %p95, %p96
    %p98 = scmp.ne.s32.totalorder %s89, %s90
    %p99 = scmp.eq.s32.totalorder %s16, 0
    %p100 = por %p98, %p99
    %p101 = scmp.ne.s32.totalorder %s89, %s90
    %p102 = scmp.eq.s32.totalorder %s17, 1
    %p103 = por %p101, %p102
    %p105 = scmp.ne.s32.totalorder %s90, %s104
    %p106 = scmp.eq.s32.totalorder %s17, 0
    %p107 = por %p105, %p106
    %s109 = sadd.s32 %s108, 1
    %p112 = scmp.eq.s32.totalorder %s11, 1
    %p113 = scmp.ne.s32.totalorder %s108, %s110
    %p114 = scmp.eq.s32.totalorder %s11, 0
    %p115 = por %p113, %p114
    %p116 = scmp.ne.s32.totalorder %s108, %s110
    %p117 = scmp.eq.s32.totalorder %s16, 1
    %p118 = por %p116, %p117
    %p119 = scmp.ne.s32.totalorder %s110, %s111
    %p120 = scmp.eq.s32.totalorder %s16, 0
    %p121 = por %p119, %p120
    %p122 = scmp.ne.s32.totalorder %s110, %s111
    %p123 = scmp.eq.s32.totalorder %s17, 1
    %p124 = por %p122, %p123
    %p126 = scmp.ne.s32.totalorder %s111, %s125
    %p127 = scmp.eq.s32.totalorder %s17, 0
    %p128 = por %p126, %p127
    %s129 = ssub.s32 %s11, %s18
    %p130 = scmp.eq.s32.totalorder %s129, 0
    %s132 = sadd.s32 %s131, 1
    %s133 = scalar_select %p130, %s131, %s132
    %p136 = pneg %p130
    %p137 = scmp.eq.s32.totalorder %s11, 1
    %p138 = por %p136, %p137
    %p139 = scmp.ne.s32.totalorder %s131, %s134
    %p140 = scmp.eq.s32.totalorder %s11, 0
    %p141 = por %p139, %p140
    %p142 = scmp.ne.s32.totalorder %s131, %s134
    %p143 = scmp.eq.s32.totalorder %s16, 1
    %p144 = por %p142, %p143
    %p145 = scmp.ne.s32.totalorder %s134, %s135
    %p146 = scmp.eq.s32.totalorder %s16, 0
    %p147 = por %p145, %p146
    %p148 = scmp.ne.s32.totalorder %s134, %s135
    %p149 = scmp.eq.s32.totalorder %s17, 1
    %p150 = por %p148, %p149
    %p152 = scmp.ne.s32.totalorder %s135, %s151
    %p153 = scmp.eq.s32.totalorder %s17, 0
    %p154 = por %p152, %p153
    %p155 = scmp.le.s32.totalorder 1, %s11
    %p156 = scmp.lt.s32.totalorder %s11, 3
    %p157 = pnand %p155, %p156
    %p158 = pneg %p157
    // Predicated region
    $region9: #{_lambda_.1} parent=5 // pred_check
      _
    $region10: #{_lambda_.1} parent=5 // pred_check_branch
      %160 = sbr.rel (%p157) target = $region12
    $region11: #{_lambda_.1} parent=5 // pred_region
      %s161 = ssub.s32 %s11, 1
      // Predicated region
      $region13: #{_lambda_.1} parent=11 // pred_check
        %p162 = pneg %p58
      $region14: #{_lambda_.1} parent=11 // pred_check_branch
        %164 = sbr.rel (%p162) target = $region16
      $region15: #{_lambda_.1} parent=11 // pred_region
        _
      $region16: #{_lambda_.1} parent=11 // pred_fallthru
        _
      // Predicated region
      $region17: #{_lambda_.1} parent=11 // pred_check
        %p165 = pneg %p79
      $region18: #{_lambda_.1} parent=11 // pred_check_branch
        %167 = sbr.rel (%p165) target = $region20
      $region19: #{_lambda_.1} parent=11 // pred_region
        _
      $region20: #{_lambda_.1} parent=11 // pred_fallthru
        _
      // Predicated region
      $region21: #{_lambda_.1} parent=11 // pred_check
        %p168 = pneg %p100
      $region22: #{_lambda_.1} parent=11 // pred_check_branch
        %170 = sbr.rel (%p168) target = $region24
      $region23: #{_lambda_.1} parent=11 // pred_region
        _
      $region24: #{_lambda_.1} parent=11 // pred_fallthru
        _
      // Predicated region
      $region25: #{_lambda_.1} parent=11 // pred_check
        %p171 = pneg %p121
      $region26: #{_lambda_.1} parent=11 // pred_check_branch
        %173 = sbr.rel (%p171) target = $region28
      $region27: #{_lambda_.1} parent=11 // pred_region
        _
      $region28: #{_lambda_.1} parent=11 // pred_fallthru
        _
    $region12: #{_lambda_.1} parent=5 // pred_fallthru
      _
    %p174 = scmp.lt.s32.totalorder %s11, 2
    // Predicated region
    $region29: #{_lambda_.1} parent=5 // pred_check
      %p175 = pneg %p174
    $region30: #{_lambda_.1} parent=5 // pred_check_branch
      %177 = sbr.rel (%p175) target = $region32
    $region31: #{_lambda_.1} parent=5 // pred_region
      // Predicated region
      $region33: #{_lambda_.1} parent=31 // pred_check
        %p178 = pneg %p31
      $region34: #{_lambda_.1} parent=31 // pred_check_branch
        %180 = sbr.rel (%p178) target = $region36
      $region35: #{_lambda_.1} parent=31 // pred_region
        %p181 = scmp.lt.s32.totalorder %s11, 1
        %s182 = scalar_select %p181, %s11, 1
        %s183 = smul.addr %s182, 7
        %s184 = smul.addr %s183, 8
        %s185 = scalar_lea.vmem %s0, %s184
      $region36: #{_lambda_.1} parent=31 // pred_fallthru
        _
    $region32: #{_lambda_.1} parent=5 // pred_fallthru
      _
    %p186 = scmp.le.s32.totalorder 1, %s11
    %p187 = scmp.lt.s32.totalorder %s11, 3
    %p188 = pnand %p186, %p187
    %p189 = pneg %p188
    // Predicated region
    $region37: #{_lambda_.1} parent=5 // pred_check
      _
    $region38: #{_lambda_.1} parent=5 // pred_check_branch
      %191 = sbr.rel (%p188) target = $region40
    $region39: #{_lambda_.1} parent=5 // pred_region
      %s192 = ssub.s32 %s11, 1
      %p193 = scmp.lt.s32.totalorder %s16, 1
      %s194 = scalar_select %p193, %s16, 1
      %s195 = smul.addr %s194, 7
      %s196 = smul.addr %s195, 8
      %s197 = scalar_lea.vmem %s0, %s196
      %p198 = pneg %p37
      %p199 = pneg %p34
      %p200 = pneg %p58
      %p201 = pneg %p55
      %p202 = pneg %p79
      %p203 = pneg %p76
      %p204 = pneg %p100
      %p205 = pneg %p97
      %p206 = pneg %p121
      %p207 = pneg %p118
      %p208 = pneg %p147
      %p209 = pneg %p144
      %p210 = scmp.lt.s32.totalorder %s16, 1
      %s211 = scalar_select %p210, %s16, 1
      %s212 = smul.addr %s211, 8
      %s213 = scalar_lea.vmem %s5, %s212
      %p214 = scmp.lt.s32.totalorder %s16, 1
      %s215 = scalar_select %p214, %s16, 1
      %s216 = smul.addr %s215, 7
      %s217 = smul.addr %s216, 8
      %s218 = scalar_lea.vmem %s0, %s217
      %p219 = scmp.lt.s32.totalorder %s16, 1
      %s220 = scalar_select %p219, %s16, 1
      %s221 = smul.addr %s220, 8
      %s222 = scalar_lea.vmem %s5, %s221
      %v223 = vld [vmem:[%s218] sm:$0xff]
      %v224 = vld [vmem:[%s218 + $0x8] sm:$0xff]
      %v225 = vld [vmem:[%s218 + $0x10] sm:$0xff]
      %v226 = vld [vmem:[%s218 + $0x18] sm:$0xff]
      %v227 = vld [vmem:[%s218 + $0x20] sm:$0xff]
      %v228 = vld [vmem:[%s218 + $0x28] sm:$0xff]
      %v229 = vld [vmem:[%s218 + $0x30] sm:$0xff]
      %v230 = vld [vmem:[%s1] sm:$0xff]
      %v231 = vld [vmem:[%s1 + $0x8] sm:$0xff]
      %v232 = vld [vmem:[%s1 + $0x10] sm:$0xff]
      %v233 = vld [vmem:[%s1 + $0x18] sm:$0xff]
      %v234 = vld [vmem:[%s1 + $0x20] sm:$0xff]
      %v235 = vld [vmem:[%s1 + $0x28] sm:$0xff]
      %v236 = vld [vmem:[%s1 + $0x30] sm:$0xff]
      %v237 = vld [vmem:[%s1 + $0x38] sm:$0xff]
      %v238 = vld [vmem:[%s1 + $0x40] sm:$0xff]
      %v239 = vld [vmem:[%s1 + $0x48] sm:$0xff]
      %v240 = vld [vmem:[%s1 + $0x50] sm:$0xff]
      %v241 = vld [vmem:[%s1 + $0x58] sm:$0xff]
      %v242 = vld [vmem:[%s1 + $0x60] sm:$0xff]
      %v243 = vld [vmem:[%s1 + $0x68] sm:$0xff]
      %v244 = vld [vmem:[%s1 + $0x70] sm:$0xff]
      %v245 = vld [vmem:[%s1 + $0x78] sm:$0xff]
      %v246 = vld [vmem:[%s1 + $0x80] sm:$0xff]
      %v247 = vld [vmem:[%s1 + $0x88] sm:$0xff]
      %v248 = vld [vmem:[%s1 + $0x90] sm:$0xff]
      %v249 = vld [vmem:[%s1 + $0x98] sm:$0xff]
      %v250 = vld [vmem:[%s1 + $0xa0] sm:$0xff]
      %v251 = vld [vmem:[%s1 + $0xa8] sm:$0xff]
      %v252 = vld [vmem:[%s1 + $0xb0] sm:$0xff]
      %v253 = vld [vmem:[%s1 + $0xb8] sm:$0xff]
      %v254 = vld [vmem:[%s1 + $0xc0] sm:$0xff]
      %v255 = vld [vmem:[%s1 + $0xc8] sm:$0xff]
      %v256 = vld [vmem:[%s1 + $0xd0] sm:$0xff]
      %v257 = vld [vmem:[%s1 + $0xd8] sm:$0xff]
      %v258 = vld [vmem:[%s1 + $0xe0] sm:$0xff]
      %v259 = vld [vmem:[%s1 + $0xe8] sm:$0xff]
      %v260 = vld [vmem:[%s1 + $0xf0] sm:$0xff]
      %v261 = vld [vmem:[%s1 + $0xf8] sm:$0xff]
      %v262 = vld [vmem:[%s1 + $0x100] sm:$0xff]
      %v263 = vld [vmem:[%s1 + $0x108] sm:$0xff]
      %v264 = vld [vmem:[%s1 + $0x110] sm:$0xff]
      %v265 = vld [vmem:[%s1 + $0x118] sm:$0xff]
      %v266 = vld [vmem:[%s1 + $0x120] sm:$0xff]
      %v267 = vld [vmem:[%s1 + $0x128] sm:$0xff]
      %v268 = vld [vmem:[%s1 + $0x130] sm:$0xff]
      %v269 = vld [vmem:[%s1 + $0x138] sm:$0xff]
      %v270 = vld [vmem:[%s1 + $0x140] sm:$0xff]
      %v271 = vld [vmem:[%s1 + $0x148] sm:$0xff]
      %v272 = vld [vmem:[%s1 + $0x150] sm:$0xff]
      %v273 = vld [vmem:[%s1 + $0x158] sm:$0xff]
      %v274 = vld [vmem:[%s1 + $0x160] sm:$0xff]
      %v275 = vld [vmem:[%s1 + $0x168] sm:$0xff]
      %v276 = vld [vmem:[%s1 + $0x170] sm:$0xff]
      %v277 = vld [vmem:[%s1 + $0x178] sm:$0xff]
      %v278 = vld [vmem:[%s1 + $0x180] sm:$0xff]
      %v279 = vld [vmem:[%s1 + $0x188] sm:$0xff]
      %v280 = vld [vmem:[%s1 + $0x190] sm:$0xff]
      %v281 = vld [vmem:[%s1 + $0x198] sm:$0xff]
      %v282 = vld [vmem:[%s1 + $0x1a0] sm:$0xff]
      %v283 = vld [vmem:[%s1 + $0x1a8] sm:$0xff]
      %v284 = vld [vmem:[%s1 + $0x1b0] sm:$0xff]
      %v285 = vld [vmem:[%s1 + $0x1b8] sm:$0xff]
      %v286 = vld [vmem:[%s1 + $0x1c0] sm:$0xff]
      %v287 = vld [vmem:[%s1 + $0x1c8] sm:$0xff]
      %v288 = vld [vmem:[%s1 + $0x1d0] sm:$0xff]
      %v289 = vld [vmem:[%s1 + $0x1d8] sm:$0xff]
      %v290 = vld [vmem:[%s1 + $0x1e0] sm:$0xff]
      %v291 = vld [vmem:[%s1 + $0x1e8] sm:$0xff]
      %v292 = vld [vmem:[%s1 + $0x1f0] sm:$0xff]
      %v293 = vld [vmem:[%s1 + $0x1f8] sm:$0xff]
      %v294 = vld [vmem:[%s1 + $0x200] sm:$0xff]
      %v295 = vld [vmem:[%s1 + $0x208] sm:$0xff]
      %v296 = vld [vmem:[%s1 + $0x210] sm:$0xff]
      %v297 = vld [vmem:[%s1 + $0x218] sm:$0xff]
      %v298 = vld [vmem:[%s1 + $0x220] sm:$0xff]
      %v299 = vld [vmem:[%s1 + $0x228] sm:$0xff]
      %v300 = vld [vmem:[%s1 + $0x230] sm:$0xff]
      %v301 = vld [vmem:[%s1 + $0x238] sm:$0xff]
      %v302 = vld [vmem:[%s1 + $0x240] sm:$0xff]
      %v303 = vld [vmem:[%s1 + $0x248] sm:$0xff]
      %v304 = vld [vmem:[%s1 + $0x250] sm:$0xff]
      %v305 = vld [vmem:[%s1 + $0x258] sm:$0xff]
      %v306 = vld [vmem:[%s1 + $0x260] sm:$0xff]
      %v307 = vld [vmem:[%s1 + $0x268] sm:$0xff]
      %v308 = vld [vmem:[%s1 + $0x270] sm:$0xff]
      %v309 = vld [vmem:[%s1 + $0x278] sm:$0xff]
      %v310 = vld [vmem:[%s1 + $0x280] sm:$0xff]
      %v311 = vld [vmem:[%s1 + $0x288] sm:$0xff]
      %v312 = vld [vmem:[%s1 + $0x290] sm:$0xff]
      %v313 = vld [vmem:[%s1 + $0x298] sm:$0xff]
      %v314 = vld [vmem:[%s1 + $0x2a0] sm:$0xff]
      %v315 = vld [vmem:[%s1 + $0x2a8] sm:$0xff]
      %v316 = vld [vmem:[%s1 + $0x2b0] sm:$0xff]
      %v317 = vld [vmem:[%s1 + $0x2b8] sm:$0xff]
      %v318 = vld [vmem:[%s1 + $0x2c0] sm:$0xff]
      %v319 = vld [vmem:[%s1 + $0x2c8] sm:$0xff]
      %v320 = vld [vmem:[%s1 + $0x2d0] sm:$0xff]
      %v321 = vld [vmem:[%s1 + $0x2d8] sm:$0xff]
      %v322 = vld [vmem:[%s1 + $0x2e0] sm:$0xff]
      %v323 = vld [vmem:[%s1 + $0x2e8] sm:$0xff]
      %v324 = vld [vmem:[%s1 + $0x2f0] sm:$0xff]
      %v325 = vld [vmem:[%s1 + $0x2f8] sm:$0xff]
      %v326 = vld [vmem:[%s1 + $0x300] sm:$0xff]
      %v327 = vld [vmem:[%s1 + $0x308] sm:$0xff]
      %v328 = vld [vmem:[%s1 + $0x310] sm:$0xff]
      %v329 = vld [vmem:[%s1 + $0x318] sm:$0xff]
      %v330 = vld [vmem:[%s1 + $0x320] sm:$0xff]
      %v331 = vld [vmem:[%s1 + $0x328] sm:$0xff]
      %v332 = vld [vmem:[%s1 + $0x330] sm:$0xff]
      %v333 = vld [vmem:[%s1 + $0x338] sm:$0xff]
      %v334 = vld [vmem:[%s1 + $0x340] sm:$0xff]
      %v335 = vld [vmem:[%s1 + $0x348] sm:$0xff]
      %v336 = vld [vmem:[%s1 + $0x350] sm:$0xff]
      %v337 = vld [vmem:[%s1 + $0x358] sm:$0xff]
      %v338 = vld [vmem:[%s1 + $0x360] sm:$0xff]
      %v339 = vld [vmem:[%s1 + $0x368] sm:$0xff]
      %v340 = vld [vmem:[%s1 + $0x370] sm:$0xff]
      %v341 = vld [vmem:[%s1 + $0x378] sm:$0xff]
      %v342 = vld [vmem:[%s1 + $0x380] sm:$0xff]
      %v343 = vld [vmem:[%s1 + $0x388] sm:$0xff]
      %v344 = vld [vmem:[%s1 + $0x390] sm:$0xff]
      %v345 = vld [vmem:[%s1 + $0x398] sm:$0xff]
      %v346 = vld [vmem:[%s1 + $0x3a0] sm:$0xff]
      %v347 = vld [vmem:[%s1 + $0x3a8] sm:$0xff]
      %v348 = vld [vmem:[%s1 + $0x3b0] sm:$0xff]
      %v349 = vld [vmem:[%s1 + $0x3b8] sm:$0xff]
      %v350 = vld [vmem:[%s1 + $0x3c0] sm:$0xff]
      %v351 = vld [vmem:[%s1 + $0x3c8] sm:$0xff]
      %v352 = vld [vmem:[%s1 + $0x3d0] sm:$0xff]
      %v353 = vld [vmem:[%s1 + $0x3d8] sm:$0xff]
      %v354 = vld [vmem:[%s1 + $0x3e0] sm:$0xff]
      %v355 = vld [vmem:[%s1 + $0x3e8] sm:$0xff]
      %v356 = vld [vmem:[%s1 + $0x3f0] sm:$0xff]
      %v357 = vld [vmem:[%s1 + $0x3f8] sm:$0xff]
      %v358 = vld [vmem:[%s1 + $0x400] sm:$0xff]
      %v359 = vld [vmem:[%s1 + $0x408] sm:$0xff]
      %v360 = vld [vmem:[%s1 + $0x410] sm:$0xff]
      %v361 = vld [vmem:[%s1 + $0x418] sm:$0xff]
      %v362 = vld [vmem:[%s1 + $0x420] sm:$0xff]
      %v363 = vld [vmem:[%s1 + $0x428] sm:$0xff]
      %v364 = vld [vmem:[%s1 + $0x430] sm:$0xff]
      %v365 = vld [vmem:[%s1 + $0x438] sm:$0xff]
      %v366 = vld [vmem:[%s1 + $0x440] sm:$0xff]
      %v367 = vld [vmem:[%s1 + $0x448] sm:$0xff]
      %v368 = vld [vmem:[%s1 + $0x450] sm:$0xff]
      %v369 = vld [vmem:[%s1 + $0x458] sm:$0xff]
      %v370 = vld [vmem:[%s1 + $0x460] sm:$0xff]
      %v371 = vld [vmem:[%s1 + $0x468] sm:$0xff]
      %v372 = vld [vmem:[%s1 + $0x470] sm:$0xff]
      %v373 = vld [vmem:[%s1 + $0x478] sm:$0xff]
      %v374 = vld [vmem:[%s1 + $0x480] sm:$0xff]
      %v375 = vld [vmem:[%s1 + $0x488] sm:$0xff]
      %v376 = vld [vmem:[%s1 + $0x490] sm:$0xff]
      %v377 = vld [vmem:[%s1 + $0x498] sm:$0xff]
      %v378 = vld [vmem:[%s1 + $0x4a0] sm:$0xff]
      %v379 = vld [vmem:[%s1 + $0x4a8] sm:$0xff]
      %v380 = vld [vmem:[%s1 + $0x4b0] sm:$0xff]
      %v381 = vld [vmem:[%s1 + $0x4b8] sm:$0xff]
      %v382 = vld [vmem:[%s1 + $0x4c0] sm:$0xff]
      %v383 = vld [vmem:[%s1 + $0x4c8] sm:$0xff]
      %v384 = vld [vmem:[%s1 + $0x4d0] sm:$0xff]
      %v385 = vld [vmem:[%s1 + $0x4d8] sm:$0xff]
      %v386 = vld [vmem:[%s1 + $0x4e0] sm:$0xff]
      %v387 = vld [vmem:[%s1 + $0x4e8] sm:$0xff]
      %v388 = vld [vmem:[%s1 + $0x4f0] sm:$0xff]
      %v389 = vld [vmem:[%s1 + $0x4f8] sm:$0xff]
      %v390 = vld [vmem:[%s1 + $0x500] sm:$0xff]
      %v391 = vld [vmem:[%s1 + $0x508] sm:$0xff]
      %v392 = vld [vmem:[%s1 + $0x510] sm:$0xff]
      %v393 = vld [vmem:[%s1 + $0x518] sm:$0xff]
      %v394 = vld [vmem:[%s1 + $0x520] sm:$0xff]
      %v395 = vld [vmem:[%s1 + $0x528] sm:$0xff]
      %v396 = vld [vmem:[%s1 + $0x530] sm:$0xff]
      %v397 = vld [vmem:[%s1 + $0x538] sm:$0xff]
      %v398 = vld [vmem:[%s1 + $0x540] sm:$0xff]
      %v399 = vld [vmem:[%s1 + $0x548] sm:$0xff]
      %v400 = vld [vmem:[%s1 + $0x550] sm:$0xff]
      %v401 = vld [vmem:[%s1 + $0x558] sm:$0xff]
      %v402 = vld [vmem:[%s1 + $0x560] sm:$0xff]
      %v403 = vld [vmem:[%s1 + $0x568] sm:$0xff]
      %v404 = vld [vmem:[%s1 + $0x570] sm:$0xff]
      %v405 = vld [vmem:[%s1 + $0x578] sm:$0xff]
      %v406 = vld [vmem:[%s1 + $0x580] sm:$0xff]
      %v407 = vld [vmem:[%s1 + $0x588] sm:$0xff]
      %v408 = vld [vmem:[%s1 + $0x590] sm:$0xff]
      %v409 = vld [vmem:[%s1 + $0x598] sm:$0xff]
      %v410 = vld [vmem:[%s1 + $0x5a0] sm:$0xff]
      %v411 = vld [vmem:[%s1 + $0x5a8] sm:$0xff]
      %v412 = vld [vmem:[%s1 + $0x5b0] sm:$0xff]
      %v413 = vld [vmem:[%s1 + $0x5b8] sm:$0xff]
      %v414 = vld [vmem:[%s1 + $0x5c0] sm:$0xff]
      %v415 = vld [vmem:[%s1 + $0x5c8] sm:$0xff]
      %v416 = vld [vmem:[%s1 + $0x5d0] sm:$0xff]
      %v417 = vld [vmem:[%s1 + $0x5d8] sm:$0xff]
      %v418 = vld [vmem:[%s1 + $0x5e0] sm:$0xff]
      %v419 = vld [vmem:[%s1 + $0x5e8] sm:$0xff]
      %v420 = vld [vmem:[%s1 + $0x5f0] sm:$0xff]
      %v421 = vld [vmem:[%s1 + $0x5f8] sm:$0xff]
      %v422 = vld [vmem:[%s1 + $0x600] sm:$0xff]
      %v423 = vld [vmem:[%s1 + $0x608] sm:$0xff]
      %v424 = vld [vmem:[%s1 + $0x610] sm:$0xff]
      %v425 = vld [vmem:[%s1 + $0x618] sm:$0xff]
      %v426 = vld [vmem:[%s1 + $0x620] sm:$0xff]
      %v427 = vld [vmem:[%s1 + $0x628] sm:$0xff]
      %v428 = vld [vmem:[%s1 + $0x630] sm:$0xff]
      %v429 = vld [vmem:[%s1 + $0x638] sm:$0xff]
      %v430 = vld [vmem:[%s1 + $0x640] sm:$0xff]
      %v431 = vld [vmem:[%s1 + $0x648] sm:$0xff]
      %v432 = vld [vmem:[%s1 + $0x650] sm:$0xff]
      %v433 = vld [vmem:[%s1 + $0x658] sm:$0xff]
      %v434 = vld [vmem:[%s1 + $0x660] sm:$0xff]
      %v435 = vld [vmem:[%s1 + $0x668] sm:$0xff]
      %v436 = vld [vmem:[%s1 + $0x670] sm:$0xff]
      %v437 = vld [vmem:[%s1 + $0x678] sm:$0xff]
      %v438 = vld [vmem:[%s1 + $0x680] sm:$0xff]
      %v439 = vld [vmem:[%s1 + $0x688] sm:$0xff]
      %v440 = vld [vmem:[%s1 + $0x690] sm:$0xff]
      %v441 = vld [vmem:[%s1 + $0x698] sm:$0xff]
      %v442 = vld [vmem:[%s1 + $0x6a0] sm:$0xff]
      %v443 = vld [vmem:[%s1 + $0x6a8] sm:$0xff]
      %v444 = vld [vmem:[%s1 + $0x6b0] sm:$0xff]
      %v445 = vld [vmem:[%s1 + $0x6b8] sm:$0xff]
      %v446 = vld [vmem:[%s1 + $0x6c0] sm:$0xff]
      %v447 = vld [vmem:[%s1 + $0x6c8] sm:$0xff]
      %v448 = vld [vmem:[%s1 + $0x6d0] sm:$0xff]
      %v449 = vld [vmem:[%s1 + $0x6d8] sm:$0xff]
      %v450 = vld [vmem:[%s1 + $0x6e0] sm:$0xff]
      %v451 = vld [vmem:[%s1 + $0x6e8] sm:$0xff]
      %v452 = vld [vmem:[%s1 + $0x6f0] sm:$0xff]
      %v453 = vld [vmem:[%s1 + $0x6f8] sm:$0xff]
      %v454 = vld [vmem:[%s1 + $0x700] sm:$0xff]
      %v455 = vld [vmem:[%s1 + $0x708] sm:$0xff]
      %v456 = vld [vmem:[%s1 + $0x710] sm:$0xff]
      %v457 = vld [vmem:[%s1 + $0x718] sm:$0xff]
      %v458 = vld [vmem:[%s1 + $0x720] sm:$0xff]
      %v459 = vld [vmem:[%s1 + $0x728] sm:$0xff]
      %v460 = vld [vmem:[%s1 + $0x730] sm:$0xff]
      %v461 = vld [vmem:[%s1 + $0x738] sm:$0xff]
      %v462 = vld [vmem:[%s1 + $0x740] sm:$0xff]
      %v463 = vld [vmem:[%s1 + $0x748] sm:$0xff]
      %v464 = vld [vmem:[%s1 + $0x750] sm:$0xff]
      %v465 = vld [vmem:[%s1 + $0x758] sm:$0xff]
      %v466 = vld [vmem:[%s1 + $0x760] sm:$0xff]
      %v467 = vld [vmem:[%s1 + $0x768] sm:$0xff]
      %v468 = vld [vmem:[%s1 + $0x770] sm:$0xff]
      %v469 = vld [vmem:[%s1 + $0x778] sm:$0xff]
      %v470 = vld [vmem:[%s1 + $0x780] sm:$0xff]
      %v471 = vld [vmem:[%s1 + $0x788] sm:$0xff]
      %v472 = vld [vmem:[%s1 + $0x790] sm:$0xff]
      %v473 = vld [vmem:[%s1 + $0x798] sm:$0xff]
      %v474 = vld [vmem:[%s1 + $0x7a0] sm:$0xff]
      %v475 = vld [vmem:[%s1 + $0x7a8] sm:$0xff]
      %v476 = vld [vmem:[%s1 + $0x7b0] sm:$0xff]
      %v477 = vld [vmem:[%s1 + $0x7b8] sm:$0xff]
      %v478 = vld [vmem:[%s1 + $0x7c0] sm:$0xff]
      %v479 = vld [vmem:[%s1 + $0x7c8] sm:$0xff]
      %v480 = vld [vmem:[%s1 + $0x7d0] sm:$0xff]
      %v481 = vld [vmem:[%s1 + $0x7d8] sm:$0xff]
      %v482 = vld [vmem:[%s1 + $0x7e0] sm:$0xff]
      %v483 = vld [vmem:[%s1 + $0x7e8] sm:$0xff]
      %v484 = vld [vmem:[%s1 + $0x7f0] sm:$0xff]
      %v485 = vld [vmem:[%s1 + $0x7f8] sm:$0xff]
      %v486 = vld [vmem:[%s1 + $0x800] sm:$0xff]
      %v487 = vld [vmem:[%s1 + $0x808] sm:$0xff]
      %v488 = vld [vmem:[%s1 + $0x810] sm:$0xff]
      %v489 = vld [vmem:[%s1 + $0x818] sm:$0xff]
      %v490 = vld [vmem:[%s1 + $0x820] sm:$0xff]
      %v491 = vld [vmem:[%s1 + $0x828] sm:$0xff]
      %v492 = vld [vmem:[%s1 + $0x830] sm:$0xff]
      %v493 = vld [vmem:[%s1 + $0x838] sm:$0xff]
      %v494 = vld [vmem:[%s1 + $0x840] sm:$0xff]
      %v495 = vld [vmem:[%s1 + $0x848] sm:$0xff]
      %v496 = vld [vmem:[%s1 + $0x850] sm:$0xff]
      %v497 = vld [vmem:[%s1 + $0x858] sm:$0xff]
      %v498 = vld [vmem:[%s1 + $0x860] sm:$0xff]
      %v499 = vld [vmem:[%s1 + $0x868] sm:$0xff]
      %v500 = vld [vmem:[%s1 + $0x870] sm:$0xff]
      %v501 = vld [vmem:[%s1 + $0x878] sm:$0xff]
      %v502 = vld [vmem:[%s1 + $0x880] sm:$0xff]
      %v503 = vld [vmem:[%s1 + $0x888] sm:$0xff]
      %v504 = vld [vmem:[%s1 + $0x890] sm:$0xff]
      %v505 = vld [vmem:[%s1 + $0x898] sm:$0xff]
      %v506 = vld [vmem:[%s1 + $0x8a0] sm:$0xff]
      %v507 = vld [vmem:[%s1 + $0x8a8] sm:$0xff]
      %v508 = vld [vmem:[%s1 + $0x8b0] sm:$0xff]
      %v509 = vld [vmem:[%s1 + $0x8b8] sm:$0xff]
      %v510 = vld [vmem:[%s1 + $0x8c0] sm:$0xff]
      %v511 = vld [vmem:[%s1 + $0x8c8] sm:$0xff]
      %v512 = vld [vmem:[%s1 + $0x8d0] sm:$0xff]
      %v513 = vld [vmem:[%s1 + $0x8d8] sm:$0xff]
      %v514 = vld [vmem:[%s1 + $0x8e0] sm:$0xff]
      %v515 = vld [vmem:[%s1 + $0x8e8] sm:$0xff]
      %v516 = vld [vmem:[%s1 + $0x8f0] sm:$0xff]
      %v517 = vld [vmem:[%s1 + $0x8f8] sm:$0xff]
      %v518 = vld [vmem:[%s1 + $0x900] sm:$0xff]
      %v519 = vld [vmem:[%s1 + $0x908] sm:$0xff]
      %v520 = vld [vmem:[%s1 + $0x910] sm:$0xff]
      %v521 = vld [vmem:[%s1 + $0x918] sm:$0xff]
      %v522 = vld [vmem:[%s1 + $0x920] sm:$0xff]
      %v523 = vld [vmem:[%s1 + $0x928] sm:$0xff]
      %v524 = vld [vmem:[%s1 + $0x930] sm:$0xff]
      %v525 = vld [vmem:[%s1 + $0x938] sm:$0xff]
      %v526 = vld [vmem:[%s1 + $0x940] sm:$0xff]
      %v527 = vld [vmem:[%s1 + $0x948] sm:$0xff]
      %v528 = vld [vmem:[%s1 + $0x950] sm:$0xff]
      %v529 = vld [vmem:[%s1 + $0x958] sm:$0xff]
      %v530 = vld [vmem:[%s1 + $0x960] sm:$0xff]
      %v531 = vld [vmem:[%s1 + $0x968] sm:$0xff]
      %v532 = vld [vmem:[%s1 + $0x970] sm:$0xff]
      %v533 = vld [vmem:[%s1 + $0x978] sm:$0xff]
      %v534 = vld [vmem:[%s1 + $0x980] sm:$0xff]
      %v535 = vld [vmem:[%s1 + $0x988] sm:$0xff]
      %v536 = vld [vmem:[%s1 + $0x990] sm:$0xff]
      %v537 = vld [vmem:[%s1 + $0x998] sm:$0xff]
      %v538 = vld [vmem:[%s1 + $0x9a0] sm:$0xff]
      %v539 = vld [vmem:[%s1 + $0x9a8] sm:$0xff]
      %v540 = vld [vmem:[%s1 + $0x9b0] sm:$0xff]
      %v541 = vld [vmem:[%s1 + $0x9b8] sm:$0xff]
      %v542 = vld [vmem:[%s1 + $0x9c0] sm:$0xff]
      %v543 = vld [vmem:[%s1 + $0x9c8] sm:$0xff]
      %v544 = vld [vmem:[%s1 + $0x9d0] sm:$0xff]
      %v545 = vld [vmem:[%s1 + $0x9d8] sm:$0xff]
      %v546 = vld [vmem:[%s1 + $0x9e0] sm:$0xff]
      %v547 = vld [vmem:[%s1 + $0x9e8] sm:$0xff]
      %v548 = vld [vmem:[%s1 + $0x9f0] sm:$0xff]
      %v549 = vld [vmem:[%s1 + $0x9f8] sm:$0xff]
      %v550 = vld [vmem:[%s1 + $0xa00] sm:$0xff]
      %v551 = vld [vmem:[%s1 + $0xa08] sm:$0xff]
      %v552 = vld [vmem:[%s1 + $0xa10] sm:$0xff]
      %v553 = vld [vmem:[%s1 + $0xa18] sm:$0xff]
      %v554 = vld [vmem:[%s1 + $0xa20] sm:$0xff]
      %v555 = vld [vmem:[%s1 + $0xa28] sm:$0xff]
      %v556 = vld [vmem:[%s1 + $0xa30] sm:$0xff]
      %v557 = vld [vmem:[%s1 + $0xa38] sm:$0xff]
      %v558 = vld [vmem:[%s1 + $0xa40] sm:$0xff]
      %v559 = vld [vmem:[%s1 + $0xa48] sm:$0xff]
      %v560 = vld [vmem:[%s1 + $0xa50] sm:$0xff]
      %v561 = vld [vmem:[%s1 + $0xa58] sm:$0xff]
      %v562 = vld [vmem:[%s1 + $0xa60] sm:$0xff]
      %v563 = vld [vmem:[%s1 + $0xa68] sm:$0xff]
      %v564 = vld [vmem:[%s1 + $0xa70] sm:$0xff]
      %v565 = vld [vmem:[%s1 + $0xa78] sm:$0xff]
      %v566 = vld [vmem:[%s1 + $0xa80] sm:$0xff]
      %v567 = vld [vmem:[%s1 + $0xa88] sm:$0xff]
      %v568 = vld [vmem:[%s1 + $0xa90] sm:$0xff]
      %v569 = vld [vmem:[%s1 + $0xa98] sm:$0xff]
      %v570 = vld [vmem:[%s1 + $0xaa0] sm:$0xff]
      %v571 = vld [vmem:[%s1 + $0xaa8] sm:$0xff]
      %v572 = vld [vmem:[%s1 + $0xab0] sm:$0xff]
      %v573 = vld [vmem:[%s1 + $0xab8] sm:$0xff]
      %v574 = vld [vmem:[%s1 + $0xac0] sm:$0xff]
      %v575 = vld [vmem:[%s1 + $0xac8] sm:$0xff]
      %v576 = vld [vmem:[%s1 + $0xad0] sm:$0xff]
      %v577 = vld [vmem:[%s1 + $0xad8] sm:$0xff]
      %v578 = vld [vmem:[%s1 + $0xae0] sm:$0xff]
      %v579 = vld [vmem:[%s1 + $0xae8] sm:$0xff]
      %v580 = vld [vmem:[%s1 + $0xaf0] sm:$0xff]
      %v581 = vld [vmem:[%s1 + $0xaf8] sm:$0xff]
      %v582 = vld [vmem:[%s1 + $0xb00] sm:$0xff]
      %v583 = vld [vmem:[%s1 + $0xb08] sm:$0xff]
      %v584 = vld [vmem:[%s1 + $0xb10] sm:$0xff]
      %v585 = vld [vmem:[%s1 + $0xb18] sm:$0xff]
      %v586 = vld [vmem:[%s1 + $0xb20] sm:$0xff]
      %v587 = vld [vmem:[%s1 + $0xb28] sm:$0xff]
      %v588 = vld [vmem:[%s1 + $0xb30] sm:$0xff]
      %v589 = vld [vmem:[%s1 + $0xb38] sm:$0xff]
      %v590 = vld [vmem:[%s1 + $0xb40] sm:$0xff]
      %v591 = vld [vmem:[%s1 + $0xb48] sm:$0xff]
      %v592 = vld [vmem:[%s1 + $0xb50] sm:$0xff]
      %v593 = vld [vmem:[%s1 + $0xb58] sm:$0xff]
      %v594 = vld [vmem:[%s1 + $0xb60] sm:$0xff]
      %v595 = vld [vmem:[%s1 + $0xb68] sm:$0xff]
      %v596 = vld [vmem:[%s1 + $0xb70] sm:$0xff]
      %v597 = vld [vmem:[%s1 + $0xb78] sm:$0xff]
      %v598 = vld [vmem:[%s1 + $0xb80] sm:$0xff]
      %v599 = vld [vmem:[%s1 + $0xb88] sm:$0xff]
      %v600 = vld [vmem:[%s1 + $0xb90] sm:$0xff]
      %v601 = vld [vmem:[%s1 + $0xb98] sm:$0xff]
      %v602 = vld [vmem:[%s1 + $0xba0] sm:$0xff]
      %v603 = vld [vmem:[%s1 + $0xba8] sm:$0xff]
      %v604 = vld [vmem:[%s1 + $0xbb0] sm:$0xff]
      %v605 = vld [vmem:[%s1 + $0xbb8] sm:$0xff]
      %v606 = vld [vmem:[%s1 + $0xbc0] sm:$0xff]
      %v607 = vld [vmem:[%s1 + $0xbc8] sm:$0xff]
      %v608 = vld [vmem:[%s1 + $0xbd0] sm:$0xff]
      %v609 = vld [vmem:[%s1 + $0xbd8] sm:$0xff]
      %v610 = vld [vmem:[%s1 + $0xbe0] sm:$0xff]
      %v611 = vld [vmem:[%s1 + $0xbe8] sm:$0xff]
      %v612 = vld [vmem:[%s1 + $0xbf0] sm:$0xff]
      %v613 = vld [vmem:[%s1 + $0xbf8] sm:$0xff]
      %v614 = vld [vmem:[%s1 + $0xc00] sm:$0xff]
      %v615 = vld [vmem:[%s1 + $0xc08] sm:$0xff]
      %v616 = vld [vmem:[%s1 + $0xc10] sm:$0xff]
      %v617 = vld [vmem:[%s1 + $0xc18] sm:$0xff]
      %v618 = vld [vmem:[%s1 + $0xc20] sm:$0xff]
      %v619 = vld [vmem:[%s1 + $0xc28] sm:$0xff]
      %v620 = vld [vmem:[%s1 + $0xc30] sm:$0xff]
      %v621 = vld [vmem:[%s1 + $0xc38] sm:$0xff]
      %v622 = vld [vmem:[%s2] sm:$0xf]
      %v624 = vperm.slane %v622, 0
      %v625 = vperm.slane %v622, 1
      %v626 = vperm.slane %v622, 2
      %v627 = vperm.slane %v622, 3
      %vm632 = vcmask 130048
      %v634 = vsel %vm632, %v229, 0
      %636 = vmatpush.msra.mxu0 %v290
      %637 = vmatpush.msra.mxu0 %v286
      %638 = vmatpush.msra.mxu0 %v282
      %639 = vmatpush.msra.mxu0 %v278
      %640 = vmatpush.msra.mxu0 %v274
      %641 = vmatpush.msra.mxu0 %v270
      %642 = vmatpush.msra.mxu0 %v266
      %643 = vmatpush.msra.mxu0 %v262
      %644 = vmatpush.msra.mxu0 %v258
      %645 = vmatpush.msra.mxu0 %v254
      %646 = vmatpush.msra.mxu0 %v250
      %647 = vmatpush.msra.mxu0 %v246
      %648 = vmatpush.msra.mxu0 %v242
      %649 = vmatpush.msra.mxu0 %v238
      %650 = vmatpush.msra.mxu0 %v234
      %651 = vmatpush.msra.mxu0 %v230
      %652 = vmatmul.f32.gmra.mxu0 %v223
      %v653 = vpop.f32.mrf.mxu0
      %v654 = vadd.f32 %v624, %v653
      %655 = vdwg.mxu0
      %656 = vmatpush.msra.mxu0 %v354
      %657 = vmatpush.msra.mxu0 %v350
      %658 = vmatpush.msra.mxu0 %v346
      %659 = vmatpush.msra.mxu0 %v342
      %660 = vmatpush.msra.mxu0 %v338
      %661 = vmatpush.msra.mxu0 %v334
      %662 = vmatpush.msra.mxu0 %v330
      %663 = vmatpush.msra.mxu0 %v326
      %664 = vmatpush.msra.mxu0 %v322
      %665 = vmatpush.msra.mxu0 %v318
      %666 = vmatpush.msra.mxu0 %v314
      %667 = vmatpush.msra.mxu0 %v310
      %668 = vmatpush.msra.mxu0 %v306
      %669 = vmatpush.msra.mxu0 %v302
      %670 = vmatpush.msra.mxu0 %v298
      %671 = vmatpush.msra.mxu0 %v294
      %672 = vmatmul.f32.gmra.mxu0 %v224
      %v673 = vpop.f32.mrf.mxu0
      %v674 = vadd.f32 %v654, %v673
      %675 = vdwg.mxu0
      %676 = vmatpush.msra.mxu0 %v418
      %677 = vmatpush.msra.mxu0 %v414
      %678 = vmatpush.msra.mxu0 %v410
      %679 = vmatpush.msra.mxu0 %v406
      %680 = vmatpush.msra.mxu0 %v402
      %681 = vmatpush.msra.mxu0 %v398
      %682 = vmatpush.msra.mxu0 %v394
      %683 = vmatpush.msra.mxu0 %v390
      %684 = vmatpush.msra.mxu0 %v386
      %685 = vmatpush.msra.mxu0 %v382
      %686 = vmatpush.msra.mxu0 %v378
      %687 = vmatpush.msra.mxu0 %v374
      %688 = vmatpush.msra.mxu0 %v370
      %689 = vmatpush.msra.mxu0 %v366
      %690 = vmatpush.msra.mxu0 %v362
      %691 = vmatpush.msra.mxu0 %v358
      %692 = vmatmul.f32.gmra.mxu0 %v225
      %v693 = vpop.f32.mrf.mxu0
      %v694 = vadd.f32 %v674, %v693
      %695 = vdwg.mxu0
      %696 = vmatpush.msra.mxu0 %v482
      %697 = vmatpush.msra.mxu0 %v478
      %698 = vmatpush.msra.mxu0 %v474
      %699 = vmatpush.msra.mxu0 %v470
      %700 = vmatpush.msra.mxu0 %v466
      %701 = vmatpush.msra.mxu0 %v462
      %702 = vmatpush.msra.mxu0 %v458
      %703 = vmatpush.msra.mxu0 %v454
      %704 = vmatpush.msra.mxu0 %v450
      %705 = vmatpush.msra.mxu0 %v446
      %706 = vmatpush.msra.mxu0 %v442
      %707 = vmatpush.msra.mxu0 %v438
      %708 = vmatpush.msra.mxu0 %v434
      %709 = vmatpush.msra.mxu0 %v430
      %710 = vmatpush.msra.mxu0 %v426
      %711 = vmatpush.msra.mxu0 %v422
      %712 = vmatmul.f32.gmra.mxu0 %v226
      %v713 = vpop.f32.mrf.mxu0
      %v714 = vadd.f32 %v694, %v713
      %715 = vdwg.mxu0
      %716 = vmatpush.msra.mxu0 %v546
      %717 = vmatpush.msra.mxu0 %v542
      %718 = vmatpush.msra.mxu0 %v538
      %719 = vmatpush.msra.mxu0 %v534
      %720 = vmatpush.msra.mxu0 %v530
      %721 = vmatpush.msra.mxu0 %v526
      %722 = vmatpush.msra.mxu0 %v522
      %723 = vmatpush.msra.mxu0 %v518
      %724 = vmatpush.msra.mxu0 %v514
      %725 = vmatpush.msra.mxu0 %v510
      %726 = vmatpush.msra.mxu0 %v506
      %727 = vmatpush.msra.mxu0 %v502
      %728 = vmatpush.msra.mxu0 %v498
      %729 = vmatpush.msra.mxu0 %v494
      %730 = vmatpush.msra.mxu0 %v490
      %731 = vmatpush.msra.mxu0 %v486
      %732 = vmatmul.f32.gmra.mxu0 %v227
      %v733 = vpop.f32.mrf.mxu0
      %v734 = vadd.f32 %v714, %v733
      %735 = vdwg.mxu0
      %736 = vmatpush.msra.mxu0 %v610
      %737 = vmatpush.msra.mxu0 %v606
      %738 = vmatpush.msra.mxu0 %v602
      %739 = vmatpush.msra.mxu0 %v598
      %740 = vmatpush.msra.mxu0 %v594
      %741 = vmatpush.msra.mxu0 %v590
      %742 = vmatpush.msra.mxu0 %v586
      %743 = vmatpush.msra.mxu0 %v582
      %744 = vmatpush.msra.mxu0 %v578
      %745 = vmatpush.msra.mxu0 %v574
      %746 = vmatpush.msra.mxu0 %v570
      %747 = vmatpush.msra.mxu0 %v566
      %748 = vmatpush.msra.mxu0 %v562
      %749 = vmatpush.msra.mxu0 %v558
      %750 = vmatpush.msra.mxu0 %v554
      %751 = vmatpush.msra.mxu0 %v550
      %752 = vmatmul.f32.gmra.mxu0 %v228
      %v753 = vpop.f32.mrf.mxu0
      %v754 = vadd.f32 %v734, %v753
      %755 = vdwg.mxu0
      %756 = vmatpush.msra.mxu0 0.0
      %757 = vmatpush.msra.mxu0 0.0
      %758 = vmatpush.msra.mxu0 0.0
      %759 = vmatpush.msra.mxu0 0.0
      %760 = vmatpush.msra.mxu0 0.0
      %761 = vmatpush.msra.mxu0 0.0
      %762 = vmatpush.msra.mxu0 0.0
      %763 = vmatpush.msra.mxu0 0.0
      %764 = vmatpush.msra.mxu0 0.0
      %765 = vmatpush.msra.mxu0 0.0
      %766 = vmatpush.msra.mxu0 0.0
      %767 = vmatpush.msra.mxu0 0.0
      %768 = vmatpush.msra.mxu0 0.0
      %769 = vmatpush.msra.mxu0 0.0
      %770 = vmatpush.msra.mxu0 %v618
      %771 = vmatpush.msra.mxu0 %v614
      %772 = vmatmul.f32.gmra.mxu0 %v634
      %v773 = vpop.f32.mrf.mxu0
      %v774 = vadd.f32 %v754, %v773
      %775 = vdwg.mxu0
      %776 = vmatpush.msra.mxu0 %v291
      %777 = vmatpush.msra.mxu0 %v287
      %778 = vmatpush.msra.mxu0 %v283
      %779 = vmatpush.msra.mxu0 %v279
      %780 = vmatpush.msra.mxu0 %v275
      %781 = vmatpush.msra.mxu0 %v271
      %782 = vmatpush.msra.mxu0 %v267
      %783 = vmatpush.msra.mxu0 %v263
      %784 = vmatpush.msra.mxu0 %v259
      %785 = vmatpush.msra.mxu0 %v255
      %786 = vmatpush.msra.mxu0 %v251
      %787 = vmatpush.msra.mxu0 %v247
      %788 = vmatpush.msra.mxu0 %v243
      %789 = vmatpush.msra.mxu0 %v239
      %790 = vmatpush.msra.mxu0 %v235
      %791 = vmatpush.msra.mxu0 %v231
      %792 = vmatmul.f32.gmra.mxu0 %v223
      %v793 = vpop.f32.mrf.mxu0
      %v794 = vadd.f32 %v625, %v793
      %795 = vdwg.mxu0
      %796 = vmatpush.msra.mxu0 %v355
      %797 = vmatpush.msra.mxu0 %v351
      %798 = vmatpush.msra.mxu0 %v347
      %799 = vmatpush.msra.mxu0 %v343
      %800 = vmatpush.msra.mxu0 %v339
      %801 = vmatpush.msra.mxu0 %v335
      %802 = vmatpush.msra.mxu0 %v331
      %803 = vmatpush.msra.mxu0 %v327
      %804 = vmatpush.msra.mxu0 %v323
      %805 = vmatpush.msra.mxu0 %v319
      %806 = vmatpush.msra.mxu0 %v315
      %807 = vmatpush.msra.mxu0 %v311
      %808 = vmatpush.msra.mxu0 %v307
      %809 = vmatpush.msra.mxu0 %v303
      %810 = vmatpush.msra.mxu0 %v299
      %811 = vmatpush.msra.mxu0 %v295
      %812 = vmatmul.f32.gmra.mxu0 %v224
      %v813 = vpop.f32.mrf.mxu0
      %v814 = vadd.f32 %v794, %v813
      %815 = vdwg.mxu0
      %816 = vmatpush.msra.mxu0 %v419
      %817 = vmatpush.msra.mxu0 %v415
      %818 = vmatpush.msra.mxu0 %v411
      %819 = vmatpush.msra.mxu0 %v407
      %820 = vmatpush.msra.mxu0 %v403
      %821 = vmatpush.msra.mxu0 %v399
      %822 = vmatpush.msra.mxu0 %v395
      %823 = vmatpush.msra.mxu0 %v391
      %824 = vmatpush.msra.mxu0 %v387
      %825 = vmatpush.msra.mxu0 %v383
      %826 = vmatpush.msra.mxu0 %v379
      %827 = vmatpush.msra.mxu0 %v375
      %828 = vmatpush.msra.mxu0 %v371
      %829 = vmatpush.msra.mxu0 %v367
      %830 = vmatpush.msra.mxu0 %v363
      %831 = vmatpush.msra.mxu0 %v359
      %832 = vmatmul.f32.gmra.mxu0 %v225
      %v833 = vpop.f32.mrf.mxu0
      %v834 = vadd.f32 %v814, %v833
      %835 = vdwg.mxu0
      %836 = vmatpush.msra.mxu0 %v483
      %837 = vmatpush.msra.mxu0 %v479
      %838 = vmatpush.msra.mxu0 %v475
      %839 = vmatpush.msra.mxu0 %v471
      %840 = vmatpush.msra.mxu0 %v467
      %841 = vmatpush.msra.mxu0 %v463
      %842 = vmatpush.msra.mxu0 %v459
      %843 = vmatpush.msra.mxu0 %v455
      %844 = vmatpush.msra.mxu0 %v451
      %845 = vmatpush.msra.mxu0 %v447
      %846 = vmatpush.msra.mxu0 %v443
      %847 = vmatpush.msra.mxu0 %v439
      %848 = vmatpush.msra.mxu0 %v435
      %849 = vmatpush.msra.mxu0 %v431
      %850 = vmatpush.msra.mxu0 %v427
      %851 = vmatpush.msra.mxu0 %v423
      %852 = vmatmul.f32.gmra.mxu0 %v226
      %v853 = vpop.f32.mrf.mxu0
      %v854 = vadd.f32 %v834, %v853
      %855 = vdwg.mxu0
      %856 = vmatpush.msra.mxu0 %v547
      %857 = vmatpush.msra.mxu0 %v543
      %858 = vmatpush.msra.mxu0 %v539
      %859 = vmatpush.msra.mxu0 %v535
      %860 = vmatpush.msra.mxu0 %v531
      %861 = vmatpush.msra.mxu0 %v527
      %862 = vmatpush.msra.mxu0 %v523
      %863 = vmatpush.msra.mxu0 %v519
      %864 = vmatpush.msra.mxu0 %v515
      %865 = vmatpush.msra.mxu0 %v511
      %866 = vmatpush.msra.mxu0 %v507
      %867 = vmatpush.msra.mxu0 %v503
      %868 = vmatpush.msra.mxu0 %v499
      %869 = vmatpush.msra.mxu0 %v495
      %870 = vmatpush.msra.mxu0 %v491
      %871 = vmatpush.msra.mxu0 %v487
      %872 = vmatmul.f32.gmra.mxu0 %v227
      %v873 = vpop.f32.mrf.mxu0
      %v874 = vadd.f32 %v854, %v873
      %875 = vdwg.mxu0
      %876 = vmatpush.msra.mxu0 %v611
      %877 = vmatpush.msra.mxu0 %v607
      %878 = vmatpush.msra.mxu0 %v603
      %879 = vmatpush.msra.mxu0 %v599
      %880 = vmatpush.msra.mxu0 %v595
      %881 = vmatpush.msra.mxu0 %v591
      %882 = vmatpush.msra.mxu0 %v587
      %883 = vmatpush.msra.mxu0 %v583
      %884 = vmatpush.msra.mxu0 %v579
      %885 = vmatpush.msra.mxu0 %v575
      %886 = vmatpush.msra.mxu0 %v571
      %887 = vmatpush.msra.mxu0 %v567
      %888 = vmatpush.msra.mxu0 %v563
      %889 = vmatpush.msra.mxu0 %v559
      %890 = vmatpush.msra.mxu0 %v555
      %891 = vmatpush.msra.mxu0 %v551
      %892 = vmatmul.f32.gmra.mxu0 %v228
      %v893 = vpop.f32.mrf.mxu0
      %v894 = vadd.f32 %v874, %v893
      %895 = vdwg.mxu0
      %896 = vmatpush.msra.mxu0 0.0
      %897 = vmatpush.msra.mxu0 0.0
      %898 = vmatpush.msra.mxu0 0.0
      %899 = vmatpush.msra.mxu0 0.0
      %900 = vmatpush.msra.mxu0 0.0
      %901 = vmatpush.msra.mxu0 0.0
      %902 = vmatpush.msra.mxu0 0.0
      %903 = vmatpush.msra.mxu0 0.0
      %904 = vmatpush.msra.mxu0 0.0
      %905 = vmatpush.msra.mxu0 0.0
      %906 = vmatpush.msra.mxu0 0.0
      %907 = vmatpush.msra.mxu0 0.0
      %908 = vmatpush.msra.mxu0 0.0
      %909 = vmatpush.msra.mxu0 0.0
      %910 = vmatpush.msra.mxu0 %v619
      %911 = vmatpush.msra.mxu0 %v615
      %912 = vmatmul.f32.gmra.mxu0 %v634
      %v913 = vpop.f32.mrf.mxu0
      %v914 = vadd.f32 %v894, %v913
      %915 = vdwg.mxu0
      %916 = vmatpush.msra.mxu0 %v292
      %917 = vmatpush.msra.mxu0 %v288
      %918 = vmatpush.msra.mxu0 %v284
      %919 = vmatpush.msra.mxu0 %v280
      %920 = vmatpush.msra.mxu0 %v276
      %921 = vmatpush.msra.mxu0 %v272
      %922 = vmatpush.msra.mxu0 %v268
      %923 = vmatpush.msra.mxu0 %v264
      %924 = vmatpush.msra.mxu0 %v260
      %925 = vmatpush.msra.mxu0 %v256
      %926 = vmatpush.msra.mxu0 %v252
      %927 = vmatpush.msra.mxu0 %v248
      %928 = vmatpush.msra.mxu0 %v244
      %929 = vmatpush.msra.mxu0 %v240
      %930 = vmatpush.msra.mxu0 %v236
      %931 = vmatpush.msra.mxu0 %v232
      %932 = vmatmul.f32.gmra.mxu0 %v223
      %v933 = vpop.f32.mrf.mxu0
      %v934 = vadd.f32 %v626, %v933
      %935 = vdwg.mxu0
      %936 = vmatpush.msra.mxu0 %v356
      %937 = vmatpush.msra.mxu0 %v352
      %938 = vmatpush.msra.mxu0 %v348
      %939 = vmatpush.msra.mxu0 %v344
      %940 = vmatpush.msra.mxu0 %v340
      %941 = vmatpush.msra.mxu0 %v336
      %942 = vmatpush.msra.mxu0 %v332
      %943 = vmatpush.msra.mxu0 %v328
      %944 = vmatpush.msra.mxu0 %v324
      %945 = vmatpush.msra.mxu0 %v320
      %946 = vmatpush.msra.mxu0 %v316
      %947 = vmatpush.msra.mxu0 %v312
      %948 = vmatpush.msra.mxu0 %v308
      %949 = vmatpush.msra.mxu0 %v304
      %950 = vmatpush.msra.mxu0 %v300
      %951 = vmatpush.msra.mxu0 %v296
      %952 = vmatmul.f32.gmra.mxu0 %v224
      %v953 = vpop.f32.mrf.mxu0
      %v954 = vadd.f32 %v934, %v953
      %955 = vdwg.mxu0
      %956 = vmatpush.msra.mxu0 %v420
      %957 = vmatpush.msra.mxu0 %v416
      %958 = vmatpush.msra.mxu0 %v412
      %959 = vmatpush.msra.mxu0 %v408
      %960 = vmatpush.msra.mxu0 %v404
      %961 = vmatpush.msra.mxu0 %v400
      %962 = vmatpush.msra.mxu0 %v396
      %963 = vmatpush.msra.mxu0 %v392
      %964 = vmatpush.msra.mxu0 %v388
      %965 = vmatpush.msra.mxu0 %v384
      %966 = vmatpush.msra.mxu0 %v380
      %967 = vmatpush.msra.mxu0 %v376
      %968 = vmatpush.msra.mxu0 %v372
      %969 = vmatpush.msra.mxu0 %v368
      %970 = vmatpush.msra.mxu0 %v364
      %971 = vmatpush.msra.mxu0 %v360
      %972 = vmatmul.f32.gmra.mxu0 %v225
      %v973 = vpop.f32.mrf.mxu0
      %v974 = vadd.f32 %v954, %v973
      %975 = vdwg.mxu0
      %976 = vmatpush.msra.mxu0 %v484
      %977 = vmatpush.msra.mxu0 %v480
      %978 = vmatpush.msra.mxu0 %v476
      %979 = vmatpush.msra.mxu0 %v472
      %980 = vmatpush.msra.mxu0 %v468
      %981 = vmatpush.msra.mxu0 %v464
      %982 = vmatpush.msra.mxu0 %v460
      %983 = vmatpush.msra.mxu0 %v456
      %984 = vmatpush.msra.mxu0 %v452
      %985 = vmatpush.msra.mxu0 %v448
      %986 = vmatpush.msra.mxu0 %v444
      %987 = vmatpush.msra.mxu0 %v440
      %988 = vmatpush.msra.mxu0 %v436
      %989 = vmatpush.msra.mxu0 %v432
      %990 = vmatpush.msra.mxu0 %v428
      %991 = vmatpush.msra.mxu0 %v424
      %992 = vmatmul.f32.gmra.mxu0 %v226
      %v993 = vpop.f32.mrf.mxu0
      %v994 = vadd.f32 %v974, %v993
      %995 = vdwg.mxu0
      %996 = vmatpush.msra.mxu0 %v548
      %997 = vmatpush.msra.mxu0 %v544
      %998 = vmatpush.msra.mxu0 %v540
      %999 = vmatpush.msra.mxu0 %v536
      %1000 = vmatpush.msra.mxu0 %v532
      %1001 = vmatpush.msra.mxu0 %v528
      %1002 = vmatpush.msra.mxu0 %v524
      %1003 = vmatpush.msra.mxu0 %v520
      %1004 = vmatpush.msra.mxu0 %v516
      %1005 = vmatpush.msra.mxu0 %v512
      %1006 = vmatpush.msra.mxu0 %v508
      %1007 = vmatpush.msra.mxu0 %v504
      %1008 = vmatpush.msra.mxu0 %v500
      %1009 = vmatpush.msra.mxu0 %v496
      %1010 = vmatpush.msra.mxu0 %v492
      %1011 = vmatpush.msra.mxu0 %v488
      %1012 = vmatmul.f32.gmra.mxu0 %v227
      %v1013 = vpop.f32.mrf.mxu0
      %v1014 = vadd.f32 %v994, %v1013
      %1015 = vdwg.mxu0
      %1016 = vmatpush.msra.mxu0 %v612
      %1017 = vmatpush.msra.mxu0 %v608
      %1018 = vmatpush.msra.mxu0 %v604
      %1019 = vmatpush.msra.mxu0 %v600
      %1020 = vmatpush.msra.mxu0 %v596
      %1021 = vmatpush.msra.mxu0 %v592
      %1022 = vmatpush.msra.mxu0 %v588
      %1023 = vmatpush.msra.mxu0 %v584
      %1024 = vmatpush.msra.mxu0 %v580
      %1025 = vmatpush.msra.mxu0 %v576
      %1026 = vmatpush.msra.mxu0 %v572
      %1027 = vmatpush.msra.mxu0 %v568
      %1028 = vmatpush.msra.mxu0 %v564
      %1029 = vmatpush.msra.mxu0 %v560
      %1030 = vmatpush.msra.mxu0 %v556
      %1031 = vmatpush.msra.mxu0 %v552
      %1032 = vmatmul.f32.gmra.mxu0 %v228
      %v1033 = vpop.f32.mrf.mxu0
      %v1034 = vadd.f32 %v1014, %v1033
      %1035 = vdwg.mxu0
      %1036 = vmatpush.msra.mxu0 0.0
      %1037 = vmatpush.msra.mxu0 0.0
      %1038 = vmatpush.msra.mxu0 0.0
      %1039 = vmatpush.msra.mxu0 0.0
      %1040 = vmatpush.msra.mxu0 0.0
      %1041 = vmatpush.msra.mxu0 0.0
      %1042 = vmatpush.msra.mxu0 0.0
      %1043 = vmatpush.msra.mxu0 0.0
      %1044 = vmatpush.msra.mxu0 0.0
      %1045 = vmatpush.msra.mxu0 0.0
      %1046 = vmatpush.msra.mxu0 0.0
      %1047 = vmatpush.msra.mxu0 0.0
      %1048 = vmatpush.msra.mxu0 0.0
      %1049 = vmatpush.msra.mxu0 0.0
      %1050 = vmatpush.msra.mxu0 %v620
      %1051 = vmatpush.msra.mxu0 %v616
      %1052 = vmatmul.f32.gmra.mxu0 %v634
      %v1053 = vpop.f32.mrf.mxu0
      %v1054 = vadd.f32 %v1034, %v1053
      %1055 = vdwg.mxu0
      %1056 = vmatpush.msra.mxu0 %v293
      %1057 = vmatpush.msra.mxu0 %v289
      %1058 = vmatpush.msra.mxu0 %v285
      %1059 = vmatpush.msra.mxu0 %v281
      %1060 = vmatpush.msra.mxu0 %v277
      %1061 = vmatpush.msra.mxu0 %v273
      %1062 = vmatpush.msra.mxu0 %v269
      %1063 = vmatpush.msra.mxu0 %v265
      %1064 = vmatpush.msra.mxu0 %v261
      %1065 = vmatpush.msra.mxu0 %v257
      %1066 = vmatpush.msra.mxu0 %v253
      %1067 = vmatpush.msra.mxu0 %v249
      %1068 = vmatpush.msra.mxu0 %v245
      %1069 = vmatpush.msra.mxu0 %v241
      %1070 = vmatpush.msra.mxu0 %v237
      %1071 = vmatpush.msra.mxu0 %v233
      %1072 = vmatmul.f32.gmra.mxu0 %v223
      %v1073 = vpop.f32.mrf.mxu0
      %v1074 = vadd.f32 %v627, %v1073
      %1075 = vdwg.mxu0
      %1076 = vmatpush.msra.mxu0 %v357
      %1077 = vmatpush.msra.mxu0 %v353
      %1078 = vmatpush.msra.mxu0 %v349
      %1079 = vmatpush.msra.mxu0 %v345
      %1080 = vmatpush.msra.mxu0 %v341
      %1081 = vmatpush.msra.mxu0 %v337
      %1082 = vmatpush.msra.mxu0 %v333
      %1083 = vmatpush.msra.mxu0 %v329
      %1084 = vmatpush.msra.mxu0 %v325
      %1085 = vmatpush.msra.mxu0 %v321
      %1086 = vmatpush.msra.mxu0 %v317
      %1087 = vmatpush.msra.mxu0 %v313
      %1088 = vmatpush.msra.mxu0 %v309
      %1089 = vmatpush.msra.mxu0 %v305
      %1090 = vmatpush.msra.mxu0 %v301
      %1091 = vmatpush.msra.mxu0 %v297
      %1092 = vmatmul.f32.gmra.mxu0 %v224
      %v1093 = vpop.f32.mrf.mxu0
      %v1094 = vadd.f32 %v1074, %v1093
      %1095 = vdwg.mxu0
      %1096 = vmatpush.msra.mxu0 %v421
      %1097 = vmatpush.msra.mxu0 %v417
      %1098 = vmatpush.msra.mxu0 %v413
      %1099 = vmatpush.msra.mxu0 %v409
      %1100 = vmatpush.msra.mxu0 %v405
      %1101 = vmatpush.msra.mxu0 %v401
      %1102 = vmatpush.msra.mxu0 %v397
      %1103 = vmatpush.msra.mxu0 %v393
      %1104 = vmatpush.msra.mxu0 %v389
      %1105 = vmatpush.msra.mxu0 %v385
      %1106 = vmatpush.msra.mxu0 %v381
      %1107 = vmatpush.msra.mxu0 %v377
      %1108 = vmatpush.msra.mxu0 %v373
      %1109 = vmatpush.msra.mxu0 %v369
      %1110 = vmatpush.msra.mxu0 %v365
      %1111 = vmatpush.msra.mxu0 %v361
      %1112 = vmatmul.f32.gmra.mxu0 %v225
      %v1113 = vpop.f32.mrf.mxu0
      %v1114 = vadd.f32 %v1094, %v1113
      %1115 = vdwg.mxu0
      %1116 = vmatpush.msra.mxu0 %v485
      %1117 = vmatpush.msra.mxu0 %v481
      %1118 = vmatpush.msra.mxu0 %v477
      %1119 = vmatpush.msra.mxu0 %v473
      %1120 = vmatpush.msra.mxu0 %v469
      %1121 = vmatpush.msra.mxu0 %v465
      %1122 = vmatpush.msra.mxu0 %v461
      %1123 = vmatpush.msra.mxu0 %v457
      %1124 = vmatpush.msra.mxu0 %v453
      %1125 = vmatpush.msra.mxu0 %v449
      %1126 = vmatpush.msra.mxu0 %v445
      %1127 = vmatpush.msra.mxu0 %v441
      %1128 = vmatpush.msra.mxu0 %v437
      %1129 = vmatpush.msra.mxu0 %v433
      %1130 = vmatpush.msra.mxu0 %v429
      %1131 = vmatpush.msra.mxu0 %v425
      %1132 = vmatmul.f32.gmra.mxu0 %v226
      %v1133 = vpop.f32.mrf.mxu0
      %v1134 = vadd.f32 %v1114, %v1133
      %1135 = vdwg.mxu0
      %1136 = vmatpush.msra.mxu0 %v549
      %1137 = vmatpush.msra.mxu0 %v545
      %1138 = vmatpush.msra.mxu0 %v541
      %1139 = vmatpush.msra.mxu0 %v537
      %1140 = vmatpush.msra.mxu0 %v533
      %1141 = vmatpush.msra.mxu0 %v529
      %1142 = vmatpush.msra.mxu0 %v525
      %1143 = vmatpush.msra.mxu0 %v521
      %1144 = vmatpush.msra.mxu0 %v517
      %1145 = vmatpush.msra.mxu0 %v513
      %1146 = vmatpush.msra.mxu0 %v509
      %1147 = vmatpush.msra.mxu0 %v505
      %1148 = vmatpush.msra.mxu0 %v501
      %1149 = vmatpush.msra.mxu0 %v497
      %1150 = vmatpush.msra.mxu0 %v493
      %1151 = vmatpush.msra.mxu0 %v489
      %1152 = vmatmul.f32.gmra.mxu0 %v227
      %v1153 = vpop.f32.mrf.mxu0
      %v1154 = vadd.f32 %v1134, %v1153
      %1155 = vdwg.mxu0
      %1156 = vmatpush.msra.mxu0 %v613
      %1157 = vmatpush.msra.mxu0 %v609
      %1158 = vmatpush.msra.mxu0 %v605
      %1159 = vmatpush.msra.mxu0 %v601
      %1160 = vmatpush.msra.mxu0 %v597
      %1161 = vmatpush.msra.mxu0 %v593
      %1162 = vmatpush.msra.mxu0 %v589
      %1163 = vmatpush.msra.mxu0 %v585
      %1164 = vmatpush.msra.mxu0 %v581
      %1165 = vmatpush.msra.mxu0 %v577
      %1166 = vmatpush.msra.mxu0 %v573
      %1167 = vmatpush.msra.mxu0 %v569
      %1168 = vmatpush.msra.mxu0 %v565
      %1169 = vmatpush.msra.mxu0 %v561
      %1170 = vmatpush.msra.mxu0 %v557
      %1171 = vmatpush.msra.mxu0 %v553
      %1172 = vmatmul.f32.gmra.mxu0 %v228
      %v1173 = vpop.f32.mrf.mxu0
      %v1174 = vadd.f32 %v1154, %v1173
      %1175 = vdwg.mxu0
      %1176 = vmatpush.msra.mxu0 0.0
      %1177 = vmatpush.msra.mxu0 0.0
      %1178 = vmatpush.msra.mxu0 0.0
      %1179 = vmatpush.msra.mxu0 0.0
      %1180 = vmatpush.msra.mxu0 0.0
      %1181 = vmatpush.msra.mxu0 0.0
      %1182 = vmatpush.msra.mxu0 0.0
      %1183 = vmatpush.msra.mxu0 0.0
      %1184 = vmatpush.msra.mxu0 0.0
      %1185 = vmatpush.msra.mxu0 0.0
      %1186 = vmatpush.msra.mxu0 0.0
      %1187 = vmatpush.msra.mxu0 0.0
      %1188 = vmatpush.msra.mxu0 0.0
      %1189 = vmatpush.msra.mxu0 0.0
      %1190 = vmatpush.msra.mxu0 %v621
      %1191 = vmatpush.msra.mxu0 %v617
      %1192 = vmatmul.f32.gmra.mxu0 %v634
      %v1193 = vpop.f32.mrf.mxu0
      %v1194 = vadd.f32 %v1174, %v1193
      %1195 = vdwg.mxu0
      %v1196 = vmax.f32 %v774, 0.0
      %v1197 = vmax.f32 %v914, 0.0
      %v1198 = vmax.f32 %v1054, 0.0
      %v1199 = vmax.f32 %v1194, 0.0
      %v1200 = vld [vmem:[%s3] sm:$0xff]
      %v1201 = vld [vmem:[%s3 + $0x8] sm:$0xff]
      %v1202 = vld [vmem:[%s3 + $0x10] sm:$0xff]
      %v1203 = vld [vmem:[%s3 + $0x18] sm:$0xff]
      %v1204 = vld [vmem:[%s3 + $0x20] sm:$0xff]
      %v1205 = vld [vmem:[%s3 + $0x28] sm:$0xff]
      %v1206 = vld [vmem:[%s3 + $0x30] sm:$0xff]
      %v1207 = vld [vmem:[%s3 + $0x38] sm:$0xff]
      %v1208 = vld [vmem:[%s3 + $0x40] sm:$0xff]
      %v1209 = vld [vmem:[%s3 + $0x48] sm:$0xff]
      %v1210 = vld [vmem:[%s3 + $0x50] sm:$0xff]
      %v1211 = vld [vmem:[%s3 + $0x58] sm:$0xff]
      %v1212 = vld [vmem:[%s3 + $0x60] sm:$0xff]
      %v1213 = vld [vmem:[%s3 + $0x68] sm:$0xff]
      %v1214 = vld [vmem:[%s3 + $0x70] sm:$0xff]
      %v1215 = vld [vmem:[%s3 + $0x78] sm:$0xff]
      %v1216 = vld [vmem:[%s3 + $0x80] sm:$0xff]
      %v1217 = vld [vmem:[%s3 + $0x88] sm:$0xff]
      %v1218 = vld [vmem:[%s3 + $0x90] sm:$0xff]
      %v1219 = vld [vmem:[%s3 + $0x98] sm:$0xff]
      %v1220 = vld [vmem:[%s3 + $0xa0] sm:$0xff]
      %v1221 = vld [vmem:[%s3 + $0xa8] sm:$0xff]
      %v1222 = vld [vmem:[%s3 + $0xb0] sm:$0xff]
      %v1223 = vld [vmem:[%s3 + $0xb8] sm:$0xff]
      %v1224 = vld [vmem:[%s3 + $0xc0] sm:$0xff]
      %v1225 = vld [vmem:[%s3 + $0xc8] sm:$0xff]
      %v1226 = vld [vmem:[%s3 + $0xd0] sm:$0xff]
      %v1227 = vld [vmem:[%s3 + $0xd8] sm:$0xff]
      %v1228 = vld [vmem:[%s3 + $0xe0] sm:$0xff]
      %v1229 = vld [vmem:[%s3 + $0xe8] sm:$0xff]
      %v1230 = vld [vmem:[%s3 + $0xf0] sm:$0xff]
      %v1231 = vld [vmem:[%s3 + $0xf8] sm:$0xff]
      %v1232 = vld [vmem:[%s3 + $0x100] sm:$0xff]
      %v1233 = vld [vmem:[%s3 + $0x108] sm:$0xff]
      %v1234 = vld [vmem:[%s3 + $0x110] sm:$0xff]
      %v1235 = vld [vmem:[%s3 + $0x118] sm:$0xff]
      %v1236 = vld [vmem:[%s3 + $0x120] sm:$0xff]
      %v1237 = vld [vmem:[%s3 + $0x128] sm:$0xff]
      %v1238 = vld [vmem:[%s3 + $0x130] sm:$0xff]
      %v1239 = vld [vmem:[%s3 + $0x138] sm:$0xff]
      %v1240 = vld [vmem:[%s3 + $0x140] sm:$0xff]
      %v1241 = vld [vmem:[%s3 + $0x148] sm:$0xff]
      %v1242 = vld [vmem:[%s3 + $0x150] sm:$0xff]
      %v1243 = vld [vmem:[%s3 + $0x158] sm:$0xff]
      %v1244 = vld [vmem:[%s3 + $0x160] sm:$0xff]
      %v1245 = vld [vmem:[%s3 + $0x168] sm:$0xff]
      %v1246 = vld [vmem:[%s3 + $0x170] sm:$0xff]
      %v1247 = vld [vmem:[%s3 + $0x178] sm:$0xff]
      %v1248 = vld [vmem:[%s3 + $0x180] sm:$0xff]
      %v1249 = vld [vmem:[%s3 + $0x188] sm:$0xff]
      %v1250 = vld [vmem:[%s3 + $0x190] sm:$0xff]
      %v1251 = vld [vmem:[%s3 + $0x198] sm:$0xff]
      %v1252 = vld [vmem:[%s3 + $0x1a0] sm:$0xff]
      %v1253 = vld [vmem:[%s3 + $0x1a8] sm:$0xff]
      %v1254 = vld [vmem:[%s3 + $0x1b0] sm:$0xff]
      %v1255 = vld [vmem:[%s3 + $0x1b8] sm:$0xff]
      %v1256 = vld [vmem:[%s3 + $0x1c0] sm:$0xff]
      %v1257 = vld [vmem:[%s3 + $0x1c8] sm:$0xff]
      %v1258 = vld [vmem:[%s3 + $0x1d0] sm:$0xff]
      %v1259 = vld [vmem:[%s3 + $0x1d8] sm:$0xff]
      %v1260 = vld [vmem:[%s3 + $0x1e0] sm:$0xff]
      %v1261 = vld [vmem:[%s3 + $0x1e8] sm:$0xff]
      %v1262 = vld [vmem:[%s3 + $0x1f0] sm:$0xff]
      %v1263 = vld [vmem:[%s3 + $0x1f8] sm:$0xff]
      %v1264 = vld [vmem:[%s4] sm:$0x1]
      %v1266 = vperm.slane %v1264, 0
      %1268 = vmatpush.msra.mxu0 %v1215
      %1269 = vmatpush.msra.mxu0 %v1214
      %1270 = vmatpush.msra.mxu0 %v1213
      %1271 = vmatpush.msra.mxu0 %v1212
      %1272 = vmatpush.msra.mxu0 %v1211
      %1273 = vmatpush.msra.mxu0 %v1210
      %1274 = vmatpush.msra.mxu0 %v1209
      %1275 = vmatpush.msra.mxu0 %v1208
      %1276 = vmatpush.msra.mxu0 %v1207
      %1277 = vmatpush.msra.mxu0 %v1206
      %1278 = vmatpush.msra.mxu0 %v1205
      %1279 = vmatpush.msra.mxu0 %v1204
      %1280 = vmatpush.msra.mxu0 %v1203
      %1281 = vmatpush.msra.mxu0 %v1202
      %1282 = vmatpush.msra.mxu0 %v1201
      %1283 = vmatpush.msra.mxu0 %v1200
      %1284 = vmatmul.f32.gmra.mxu0 %v1196
      %v1285 = vpop.f32.mrf.mxu0
      %v1286 = vadd.f32 %v1266, %v1285
      %1287 = vdwg.mxu0
      %1288 = vmatpush.msra.mxu0 %v1231
      %1289 = vmatpush.msra.mxu0 %v1230
      %1290 = vmatpush.msra.mxu0 %v1229
      %1291 = vmatpush.msra.mxu0 %v1228
      %1292 = vmatpush.msra.mxu0 %v1227
      %1293 = vmatpush.msra.mxu0 %v1226
      %1294 = vmatpush.msra.mxu0 %v1225
      %1295 = vmatpush.msra.mxu0 %v1224
      %1296 = vmatpush.msra.mxu0 %v1223
      %1297 = vmatpush.msra.mxu0 %v1222
      %1298 = vmatpush.msra.mxu0 %v1221
      %1299 = vmatpush.msra.mxu0 %v1220
      %1300 = vmatpush.msra.mxu0 %v1219
      %1301 = vmatpush.msra.mxu0 %v1218
      %1302 = vmatpush.msra.mxu0 %v1217
      %1303 = vmatpush.msra.mxu0 %v1216
      %1304 = vmatmul.f32.gmra.mxu0 %v1197
      %v1305 = vpop.f32.mrf.mxu0
      %v1306 = vadd.f32 %v1286, %v1305
      %1307 = vdwg.mxu0
      %1308 = vmatpush.msra.mxu0 %v1247
      %1309 = vmatpush.msra.mxu0 %v1246
      %1310 = vmatpush.msra.mxu0 %v1245
      %1311 = vmatpush.msra.mxu0 %v1244
      %1312 = vmatpush.msra.mxu0 %v1243
      %1313 = vmatpush.msra.mxu0 %v1242
      %1314 = vmatpush.msra.mxu0 %v1241
      %1315 = vmatpush.msra.mxu0 %v1240
      %1316 = vmatpush.msra.mxu0 %v1239
      %1317 = vmatpush.msra.mxu0 %v1238
      %1318 = vmatpush.msra.mxu0 %v1237
      %1319 = vmatpush.msra.mxu0 %v1236
      %1320 = vmatpush.msra.mxu0 %v1235
      %1321 = vmatpush.msra.mxu0 %v1234
      %1322 = vmatpush.msra.mxu0 %v1233
      %1323 = vmatpush.msra.mxu0 %v1232
      %1324 = vmatmul.f32.gmra.mxu0 %v1198
      %v1325 = vpop.f32.mrf.mxu0
      %v1326 = vadd.f32 %v1306, %v1325
      %1327 = vdwg.mxu0
      %1328 = vmatpush.msra.mxu0 %v1263
      %1329 = vmatpush.msra.mxu0 %v1262
      %1330 = vmatpush.msra.mxu0 %v1261
      %1331 = vmatpush.msra.mxu0 %v1260
      %1332 = vmatpush.msra.mxu0 %v1259
      %1333 = vmatpush.msra.mxu0 %v1258
      %1334 = vmatpush.msra.mxu0 %v1257
      %1335 = vmatpush.msra.mxu0 %v1256
      %1336 = vmatpush.msra.mxu0 %v1255
      %1337 = vmatpush.msra.mxu0 %v1254
      %1338 = vmatpush.msra.mxu0 %v1253
      %1339 = vmatpush.msra.mxu0 %v1252
      %1340 = vmatpush.msra.mxu0 %v1251
      %1341 = vmatpush.msra.mxu0 %v1250
      %1342 = vmatpush.msra.mxu0 %v1249
      %1343 = vmatpush.msra.mxu0 %v1248
      %1344 = vmatmul.f32.gmra.mxu0 %v1199
      %v1345 = vpop.f32.mrf.mxu0
      %v1346 = vadd.f32 %v1326, %v1345
      %1347 = vdwg.mxu0
      %vm1348 = vcmask 326656
      %1349 = vst.msk [vmem:[%s222] sm:$0xff] %vm1348, %v1346
      %p1350 = scmp.lt.s32.totalorder %s16, 1
      %s1351 = scalar_select %p1350, %s16, 1
      %s1352 = smul.addr %s1351, 8
      %s1353 = scalar_lea.vmem %s5, %s1352
      // Predicated region
      $region41: #{_lambda_.1} parent=39 // pred_check
        %p1354 = pneg %p144
      $region42: #{_lambda_.1} parent=39 // pred_check_branch
        %1356 = sbr.rel (%p1354) target = $region44
      $region43: #{_lambda_.1} parent=39 // pred_region
        _
      $region44: #{_lambda_.1} parent=39 // pred_fallthru
        _
    $region40: #{_lambda_.1} parent=5 // pred_fallthru
      _
    %p1357 = scmp.le.s32.totalorder 2, %s11
    // Predicated region
    $region45: #{_lambda_.1} parent=5 // pred_check
      %p1358 = pneg %p1357
    $region46: #{_lambda_.1} parent=5 // pred_check_branch
      %1360 = sbr.rel (%p1358) target = $region48
    $region47: #{_lambda_.1} parent=5 // pred_region
      %s1361 = ssub.s32 %s11, 2
      // Predicated region
      $region49: #{_lambda_.1} parent=47 // pred_check
        %p1362 = pneg %p150
      $region50: #{_lambda_.1} parent=47 // pred_check_branch
        %1364 = sbr.rel (%p1362) target = $region52
      $region51: #{_lambda_.1} parent=47 // pred_region
        %p1365 = scmp.lt.s32.totalorder %s17, 1
        %s1366 = scalar_select %p1365, %s17, 1
        %s1367 = smul.addr %s1366, 8
        %s1368 = scalar_lea.vmem %s5, %s1367
      $region52: #{_lambda_.1} parent=47 // pred_fallthru
        _
    $region48: #{_lambda_.1} parent=5 // pred_fallthru
      _
  $region6: #{_lambda_.1} parent=0 // loop_footer
    %s15 = sadd.s32 1, %s11
  $region7: #{_lambda_.1} parent=0 // loop_footer_branch
    %10 = sbr.rel target = $region3
  $region8: #{_lambda_.1} parent=0 // loop_exit
    _

</llo_original>
